<compile_context>
chip_gen: v5e
topology: v5e:2x2
jax: 0.10.0
libtpu: 0.0.40
codegen_flags: <defaults>
</compile_context>

<pallas_src>
import functools

import jax
import jax.numpy as jnp
from jax.experimental import pallas as pl
from jax.experimental.pallas import tpu as pltpu


def _interp_matrix(out_size: int, in_size: int) -> jnp.ndarray:
    """Bilinear (align_corners=True) 1-D interpolation matrix [out_size, in_size]."""
    if in_size == 1:
        return jnp.ones((out_size, 1), jnp.float32)
    o = jnp.arange(out_size, dtype=jnp.float32)
    if out_size == 1:
        src = jnp.zeros((1,), jnp.float32)
    else:
        src = o * (in_size - 1) / (out_size - 1)
    i0 = jnp.clip(jnp.floor(src).astype(jnp.int32), 0, in_size - 2)
    frac = src - i0.astype(jnp.float32)
    oh0 = jax.nn.one_hot(i0, in_size, dtype=jnp.float32)
    oh1 = jax.nn.one_hot(i0 + 1, in_size, dtype=jnp.float32)
    return oh0 * (1.0 - frac)[:, None] + oh1 * frac[:, None]


def _choose_row_tile(h, w, cin, cout, h2, w2, itemsize, budget_bytes):
    """Largest H-row tile TH (divisor of H) that satisfies Mosaic block constraints
    ((8,128)-divisible or full-extent minor dims) and fits the VMEM budget."""
    candidates = [th for th in range(h, 0, -1)
                  if h % th == 0 and (th == h or (th % 8 == 0 and (th * w) % 128 == 0))]

    def vmem_estimate(th):
        s = th * w
        io = 2 * (cin * s * itemsize + cout * s * 4)            # double-buffered c1 + out tiles
        resident = (2 * cout * h2 * w2 * itemsize + cout * cin * itemsize + cout * 4
                    + (h * h2 + w * w2) * itemsize)              # c2, W, bias, A_h, A_w
        temps = (cout * s * 4                                    # y (f32)
                 + cout * h2 * w * 4 + cout * s * 4              # u, up (f32)
                 + cout * (th * h2 + w * w2) * itemsize)         # broadcast interp factors
        return io + resident + temps

    for th in candidates:
        if th <= 64 and vmem_estimate(th) <= budget_bytes:
            return th
    return candidates[-1]   # smallest legal tile as a fallback


def _local_up_kernel(c1_ref, c2_ref, w_ref, b_ref, ah_ref, aw_ref, o_ref):
    # c1_ref: (1, Cin, TH*W)    flattened rows of this H-tile (lane-dense spatial)
    # c2_ref: (1, Cout, h2, w2) full coarse map (VMEM-resident across row tiles)
    # w_ref : (Cout, Cin)       1x1 conv weight with the BN scale folded in
    # b_ref : (Cout, 1)         folded BN bias (f32)
    # ah_ref: (TH, h2)          H-direction interpolation rows for this tile
    # aw_ref: (W, w2)           W-direction interpolation matrix
    # o_ref : (1, Cout, TH, W)  output tile (NCHW)
    th, h2 = ah_ref.shape
    w_out, w2 = aw_ref.shape

    # 1x1 conv (+ folded BN scale) on the MXU, f32 accumulation, spatial dim on lanes.
    x = c1_ref[0]                                                     # (Cin, TH*W)
    y = jnp.dot(w_ref[...], x, preferred_element_type=jnp.float32)    # (Cout, TH*W)
    y = jnp.maximum(y + b_ref[...], 0.0)                              # BN bias + ReLU

    # Separable bilinear upsample of c2: W-pass then H-pass, batched over Cout (MXU).
    z = c2_ref[0]                                                     # (Cout, h2, w2)
    cout = z.shape[0]
    aw_b = jnp.broadcast_to(aw_ref[...], (cout, w_out, w2))           # (Cout, W, w2)
    u = jnp.einsum('ckl,cwl->ckw', z, aw_b,
                   preferred_element_type=jnp.float32)                # (Cout, h2, W)
    ah_b = jnp.broadcast_to(ah_ref[...], (cout, th, h2))              # (Cout, TH, h2)
    up = jnp.einsum('crk,ckw->crw', ah_b, u.astype(ah_b.dtype),
                    preferred_element_type=jnp.float32)               # (Cout, TH, W)

    # Add + store, one output row (W lanes) at a time.
    # TODO(synk): with W a multiple of 128 this could be a single lane-dense (Cout, TH*W)
    # store; Mosaic cannot cheaply reshape (Cout, TH, W) -> (Cout, TH*W) for unaligned W.
    for r in range(th):
        row = y[:, r * w_out:(r + 1) * w_out] + up[:, r, :]           # (Cout, W)
        o_ref[0, :, r, :] = row.astype(o_ref.dtype)


@functools.partial(jax.jit, static_argnames=("eps", "compute_dtype"))
def local_up_forward(c1, c2, conv_w, bn_gamma, bn_beta, bn_mean, bn_var,
                     eps=1e-5, compute_dtype=jnp.float32):
    """c1: (N, Cin, H, W); c2: (N, Cout, h2, w2); conv_w: (Cout, Cin, 1, 1). Returns NCHW f32."""
    n, cin, h, w = c1.shape
    _, cout, h2, w2 = c2.shape
    itemsize = jnp.dtype(compute_dtype).itemsize

    # Fold BN (inference statistics): scale into the conv weight, bias stays a vector.
    scale = (bn_gamma / jnp.sqrt(bn_var + eps)).astype(jnp.float32)            # (Cout,)
    w_mat = (conv_w.reshape(cout, cin).astype(jnp.float32)
             * scale[:, None]).astype(compute_dtype)                          # (Cout, Cin)
    bias = (bn_beta - bn_mean * scale).reshape(cout, 1).astype(jnp.float32)    # (Cout, 1)

    # Separable bilinear (align_corners=True) interpolation factors.
    a_h = _interp_matrix(h, h2).astype(compute_dtype)                          # (H, h2)
    a_w = _interp_matrix(w, w2).astype(compute_dtype)                          # (W, w2)

    # NCHW-native inputs; only a free contiguous reshape on c1 (no transposes).
    c1_f = c1.reshape(n, cin, h * w).astype(compute_dtype)                     # (N, Cin, H*W)
    c2_c = c2.astype(compute_dtype)                                            # (N, Cout, h2, w2)

    th_tile = _choose_row_tile(h, w, cin, cout, h2, w2, itemsize,
                               budget_bytes=32 * 1024 * 1024)
    s_tile = th_tile * w

    grid_spec = pltpu.PrefetchScalarGridSpec(
        num_scalar_prefetch=0,
        grid=(n, h // th_tile),
        in_specs=[
            pl.BlockSpec((1, cin, s_tile), lambda b, t: (b, 0, t)),
            pl.BlockSpec((1, cout, h2, w2), lambda b, t: (b, 0, 0, 0)),
            pl.BlockSpec((cout, cin), lambda b, t: (0, 0)),
            pl.BlockSpec((cout, 1), lambda b, t: (0, 0)),
            pl.BlockSpec((th_tile, h2), lambda b, t: (t, 0)),
            pl.BlockSpec((w, w2), lambda b, t: (0, 0)),
        ],
        out_specs=pl.BlockSpec((1, cout, th_tile, w), lambda b, t: (b, 0, t, 0)),
    )

    out = pl.pallas_call(
        _local_up_kernel,
        out_shape=jax.ShapeDtypeStruct((n, cout, h, w), jnp.float32),
        grid_spec=grid_spec,
        compiler_params=pltpu.CompilerParams(
            dimension_semantics=("parallel", "parallel"),
            vmem_limit_bytes=48 * 1024 * 1024),
    )(c1_f, c2_c, w_mat, bias, a_h, a_w)
    return out                                                                  # NCHW already


def _reference(c1, c2, conv_w, bn_gamma, bn_beta, bn_mean, bn_var, eps=1e-5):
    n, cin, h, w = c1.shape
    _, cout, h2, w2 = c2.shape
    scale = bn_gamma / jnp.sqrt(bn_var + eps)
    w_mat = conv_w.reshape(cout, cin) * scale[:, None]
    bias = bn_beta - bn_mean * scale
    y = jnp.einsum('oi,nihw->nohw', w_mat, c1) + bias[None, :, None, None]
    y = jnp.maximum(y, 0.0)
    a_h = _interp_matrix(h, h2)
    a_w = _interp_matrix(w, w2)
    up = jnp.einsum('Hk,Wl,nckl->ncHW', a_h, a_w, c2)
    return y + up


if __name__ == "__main__":
    key = jax.random.PRNGKey(0)
    k1, k2, k3, k4, k5 = jax.random.split(key, 5)

    N, CIN, COUT = 2, 4, 8
    H, W = 16, 16          # c1 spatial size (output size)
    H2, W2 = 8, 8          # c2 (coarse) spatial size

    c1 = jax.random.normal(k1, (N, CIN, H, W), dtype=jnp.float32)
    c2 = jax.random.normal(k2, (N, COUT, H2, W2), dtype=jnp.float32)

    # nn.Conv2d(in, out, 1, bias=False): weight (COUT, CIN, 1, 1)
    conv_w = jax.random.normal(k3, (COUT, CIN, 1, 1), dtype=jnp.float32) * 0.1
    # norm_layer(out_channels) -> BatchNorm2d(COUT), inference statistics
    bn_gamma = 1.0 + 0.1 * jax.random.normal(k4, (COUT,), dtype=jnp.float32)
    bn_beta = 0.1 * jax.random.normal(k5, (COUT,), dtype=jnp.float32)
    bn_mean = jnp.zeros((COUT,), jnp.float32)
    bn_var = jnp.ones((COUT,), jnp.float32)

    ref = _reference(c1, c2, conv_w, bn_gamma, bn_beta, bn_mean, bn_var)

    # f32 path (exact vs reference)
    out = local_up_forward(c1, c2, conv_w, bn_gamma, bn_beta, bn_mean, bn_var)
    out = jax.block_until_ready(out)
    assert out.shape == (N, COUT, H, W)
    assert jnp.allclose(out, ref, atol=1e-4, rtol=1e-4)

    # bf16-input path (v5e/v6e feedback): bf16 operands, f32 accumulation, f32 output.
    out_bf16 = local_up_forward(c1, c2, conv_w, bn_gamma, bn_beta, bn_mean, bn_var,
                                compute_dtype=jnp.bfloat16)
    out_bf16 = jax.block_until_ready(out_bf16)
    assert jnp.allclose(out_bf16, ref, atol=5e-2, rtol=5e-2)

    print("KERNEL_OK")
</pallas_src>

<mosaic_0001>
module attributes {stable_mosaic.version = 11 : i64} {
  func.func @_local_up_kernel(%arg0: i32, %arg1: i32, %arg2: memref<1x4x256xf32, #tpu.memory_space<vmem>>, %arg3: memref<1x8x8x8xf32, #tpu.memory_space<vmem>>, %arg4: memref<8x4xf32, #tpu.memory_space<vmem>>, %arg5: memref<8x1xf32, #tpu.memory_space<vmem>>, %arg6: memref<16x8xf32, #tpu.memory_space<vmem>>, %arg7: memref<16x8xf32, #tpu.memory_space<vmem>>, %arg8: memref<1x8x16x16xf32, #tpu.memory_space<vmem>>) attributes {dimension_semantics = [#tpu.dimension_semantics<parallel>, #tpu.dimension_semantics<parallel>], iteration_bounds = array<i64: 2, 1>, scalar_prefetch = 0 : i64, scratch_operands = 0 : i64, tpu.core_type = #tpu.core_type<tc>, window_params = [{transform_indices = @transform_0, window_bounds = array<i64: 1, 4, 256>}, {transform_indices = @transform_1, window_bounds = array<i64: 1, 8, 8, 8>}, {pipeline_mode = #tpu.pipeline_mode<synchronous>, transform_indices = @transform_2, window_bounds = array<i64: 8, 4>}, {pipeline_mode = #tpu.pipeline_mode<synchronous>, transform_indices = @transform_3, window_bounds = array<i64: 8, 1>}, {transform_indices = @transform_4, window_bounds = array<i64: 16, 8>}, {pipeline_mode = #tpu.pipeline_mode<synchronous>, transform_indices = @transform_5, window_bounds = array<i64: 16, 8>}, {transform_indices = @transform_6, window_bounds = array<i64: 1, 8, 16, 16>}]} {
    %c0 = arith.constant 0 : index
    %c0_0 = arith.constant 0 : index
    %c0_1 = arith.constant 0 : index
    %0 = vector.load %arg2[%c0, %c0_0, %c0_1] : memref<1x4x256xf32, #tpu.memory_space<vmem>>, vector<1x4x256xf32>
    %1 = vector.shape_cast %0 : vector<1x4x256xf32> to vector<4x256xf32>
    %c0_2 = arith.constant 0 : index
    %c0_3 = arith.constant 0 : index
    %2 = vector.load %arg4[%c0_2, %c0_3] : memref<8x4xf32, #tpu.memory_space<vmem>>, vector<8x4xf32>
    %cst = arith.constant dense<0.000000e+00> : vector<8x256xf32>
    %3 = tpu.matmul %2, %1, %cst {dimension_numbers = #tpu.dot_dimension_numbers<[1], [0], [0], [1], [0, 0, 1, 1], [], []>} : vector<8x4xf32>, vector<4x256xf32>, vector<8x256xf32> -> vector<8x256xf32>
    %c0_4 = arith.constant 0 : index
    %c0_5 = arith.constant 0 : index
    %4 = vector.load %arg5[%c0_4, %c0_5] : memref<8x1xf32, #tpu.memory_space<vmem>>, vector<8x1xf32>
    %5 = vector.broadcast %4 : vector<8x1xf32> to vector<8x256xf32>
    %6 = arith.addf %3, %5 : vector<8x256xf32>
    %cst_6 = arith.constant 0.000000e+00 : f32
    %7 = vector.broadcast %cst_6 : f32 to vector<8x256xf32>
    %8 = arith.maximumf %6, %7 : vector<8x256xf32>
    %c0_7 = arith.constant 0 : index
    %c0_8 = arith.constant 0 : index
    %c0_9 = arith.constant 0 : index
    %c0_10 = arith.constant 0 : index
    %9 = vector.load %arg3[%c0_7, %c0_8, %c0_9, %c0_10] : memref<1x8x8x8xf32, #tpu.memory_space<vmem>>, vector<1x8x8x8xf32>
    %10 = vector.shape_cast %9 : vector<1x8x8x8xf32> to vector<8x8x8xf32>
    %c0_11 = arith.constant 0 : index
    %c0_12 = arith.constant 0 : index
    %11 = vector.load %arg7[%c0_11, %c0_12] : memref<16x8xf32, #tpu.memory_space<vmem>>, vector<16x8xf32>
    %12 = vector.shape_cast %11 : vector<16x8xf32> to vector<1x16x8xf32>
    %13 = vector.broadcast %12 : vector<1x16x8xf32> to vector<8x16x8xf32>
    "tpu.trace_start"() <{level = 10 : i32, message = "ckl,cwl->ckw"}> : () -> ()
    %cst_13 = arith.constant dense<0.000000e+00> : vector<8x8x16xf32>
    %14 = tpu.matmul %10, %13, %cst_13 {dimension_numbers = #tpu.dot_dimension_numbers<[2], [2], [1], [1], [0, 0, 0, 1, 1, 1], [0], [0]>} : vector<8x8x8xf32>, vector<8x16x8xf32>, vector<8x8x16xf32> -> vector<8x8x16xf32>
    "tpu.trace_stop"() : () -> ()
    %c0_14 = arith.constant 0 : index
    %c0_15 = arith.constant 0 : index
    %15 = vector.load %arg6[%c0_14, %c0_15] : memref<16x8xf32, #tpu.memory_space<vmem>>, vector<16x8xf32>
    %16 = vector.shape_cast %15 : vector<16x8xf32> to vector<1x16x8xf32>
    %17 = vector.broadcast %16 : vector<1x16x8xf32> to vector<8x16x8xf32>
    "tpu.trace_start"() <{level = 10 : i32, message = "crk,ckw->crw"}> : () -> ()
    %cst_16 = arith.constant dense<0.000000e+00> : vector<8x16x16xf32>
    %18 = tpu.matmul %17, %14, %cst_16 {dimension_numbers = #tpu.dot_dimension_numbers<[2], [1], [1], [2], [0, 0, 0, 1, 1, 2], [0], [0]>} : vector<8x16x8xf32>, vector<8x8x16xf32>, vector<8x16x16xf32> -> vector<8x16x16xf32>
    "tpu.trace_stop"() : () -> ()
    %19 = vector.extract_strided_slice %8 {offsets = [0, 0], sizes = [8, 16], strides = [1, 1]} : vector<8x256xf32> to vector<8x16xf32>
    %20 = vector.extract_strided_slice %18 {offsets = [0, 0, 0], sizes = [8, 1, 16], strides = [1, 1, 1]} : vector<8x16x16xf32> to vector<8x1x16xf32>
    %21 = vector.shape_cast %20 : vector<8x1x16xf32> to vector<8x16xf32>
    %22 = arith.addf %19, %21 : vector<8x16xf32>
    %c0_17 = arith.constant 0 : index
    %c0_18 = arith.constant 0 : index
    %c0_19 = arith.constant 0 : index
    %c0_20 = arith.constant 0 : index
    %23 = vector.load %arg8[%c0_17, %c0_18, %c0_19, %c0_20] : memref<1x8x16x16xf32, #tpu.memory_space<vmem>>, vector<1x8x1x16xf32>
    %24 = vector.shape_cast %23 : vector<1x8x1x16xf32> to vector<8x16xf32>
    %25 = vector.shape_cast %22 : vector<8x16xf32> to vector<1x8x1x16xf32>
    tpu.vector_store %arg8[%c0_17, %c0_18, %c0_19, %c0_20], %25 {strides = array<i32>} : memref<1x8x16x16xf32, #tpu.memory_space<vmem>>, vector<1x8x1x16xf32>,
    %26 = vector.extract_strided_slice %8 {offsets = [0, 16], sizes = [8, 16], strides = [1, 1]} : vector<8x256xf32> to vector<8x16xf32>
    %27 = vector.extract_strided_slice %18 {offsets = [0, 1, 0], sizes = [8, 1, 16], strides = [1, 1, 1]} : vector<8x16x16xf32> to vector<8x1x16xf32>
    %28 = vector.shape_cast %27 : vector<8x1x16xf32> to vector<8x16xf32>
    %29 = arith.addf %26, %28 : vector<8x16xf32>
    %c0_21 = arith.constant 0 : index
    %c0_22 = arith.constant 0 : index
    %c1 = arith.constant 1 : index
    %c0_23 = arith.constant 0 : index
    %30 = vector.load %arg8[%c0_21, %c0_22, %c1, %c0_23] : memref<1x8x16x16xf32, #tpu.memory_space<vmem>>, vector<1x8x1x16xf32>
    %31 = vector.shape_cast %30 : vector<1x8x1x16xf32> to vector<8x16xf32>
    %32 = vector.shape_cast %29 : vector<8x16xf32> to vector<1x8x1x16xf32>
    tpu.vector_store %arg8[%c0_21, %c0_22, %c1, %c0_23], %32 {strides = array<i32>} : memref<1x8x16x16xf32, #tpu.memory_space<vmem>>, vector<1x8x1x16xf32>,
    %33 = vector.extract_strided_slice %8 {offsets = [0, 32], sizes = [8, 16], strides = [1, 1]} : vector<8x256xf32> to vector<8x16xf32>
    %34 = vector.extract_strided_slice %18 {offsets = [0, 2, 0], sizes = [8, 1, 16], strides = [1, 1, 1]} : vector<8x16x16xf32> to vector<8x1x16xf32>
    %35 = vector.shape_cast %34 : vector<8x1x16xf32> to vector<8x16xf32>
    %36 = arith.addf %33, %35 : vector<8x16xf32>
    %c0_24 = arith.constant 0 : index
    %c0_25 = arith.constant 0 : index
    %c2 = arith.constant 2 : index
    %c0_26 = arith.constant 0 : index
    %37 = vector.load %arg8[%c0_24, %c0_25, %c2, %c0_26] : memref<1x8x16x16xf32, #tpu.memory_space<vmem>>, vector<1x8x1x16xf32>
    %38 = vector.shape_cast %37 : vector<1x8x1x16xf32> to vector<8x16xf32>
    %39 = vector.shape_cast %36 : vector<8x16xf32> to vector<1x8x1x16xf32>
    tpu.vector_store %arg8[%c0_24, %c0_25, %c2, %c0_26], %39 {strides = array<i32>} : memref<1x8x16x16xf32, #tpu.memory_space<vmem>>, vector<1x8x1x16xf32>,
    %40 = vector.extract_strided_slice %8 {offsets = [0, 48], sizes = [8, 16], strides = [1, 1]} : vector<8x256xf32> to vector<8x16xf32>
    %41 = vector.extract_strided_slice %18 {offsets = [0, 3, 0], sizes = [8, 1, 16], strides = [1, 1, 1]} : vector<8x16x16xf32> to vector<8x1x16xf32>
    %42 = vector.shape_cast %41 : vector<8x1x16xf32> to vector<8x16xf32>
    %43 = arith.addf %40, %42 : vector<8x16xf32>
    %c0_27 = arith.constant 0 : index
    %c0_28 = arith.constant 0 : index
    %c3 = arith.constant 3 : index
    %c0_29 = arith.constant 0 : index
    %44 = vector.load %arg8[%c0_27, %c0_28, %c3, %c0_29] : memref<1x8x16x16xf32, #tpu.memory_space<vmem>>, vector<1x8x1x16xf32>
    %45 = vector.shape_cast %44 : vector<1x8x1x16xf32> to vector<8x16xf32>
    %46 = vector.shape_cast %43 : vector<8x16xf32> to vector<1x8x1x16xf32>
    tpu.vector_store %arg8[%c0_27, %c0_28, %c3, %c0_29], %46 {strides = array<i32>} : memref<1x8x16x16xf32, #tpu.memory_space<vmem>>, vector<1x8x1x16xf32>,
    %47 = vector.extract_strided_slice %8 {offsets = [0, 64], sizes = [8, 16], strides = [1, 1]} : vector<8x256xf32> to vector<8x16xf32>
    %48 = vector.extract_strided_slice %18 {offsets = [0, 4, 0], sizes = [8, 1, 16], strides = [1, 1, 1]} : vector<8x16x16xf32> to vector<8x1x16xf32>
    %49 = vector.shape_cast %48 : vector<8x1x16xf32> to vector<8x16xf32>
    %50 = arith.addf %47, %49 : vector<8x16xf32>
    %c0_30 = arith.constant 0 : index
    %c0_31 = arith.constant 0 : index
    %c4 = arith.constant 4 : index
    %c0_32 = arith.constant 0 : index
    %51 = vector.load %arg8[%c0_30, %c0_31, %c4, %c0_32] : memref<1x8x16x16xf32, #tpu.memory_space<vmem>>, vector<1x8x1x16xf32>
    %52 = vector.shape_cast %51 : vector<1x8x1x16xf32> to vector<8x16xf32>
    %53 = vector.shape_cast %50 : vector<8x16xf32> to vector<1x8x1x16xf32>
    tpu.vector_store %arg8[%c0_30, %c0_31, %c4, %c0_32], %53 {strides = array<i32>} : memref<1x8x16x16xf32, #tpu.memory_space<vmem>>, vector<1x8x1x16xf32>,
    %54 = vector.extract_strided_slice %8 {offsets = [0, 80], sizes = [8, 16], strides = [1, 1]} : vector<8x256xf32> to vector<8x16xf32>
    %55 = vector.extract_strided_slice %18 {offsets = [0, 5, 0], sizes = [8, 1, 16], strides = [1, 1, 1]} : vector<8x16x16xf32> to vector<8x1x16xf32>
    %56 = vector.shape_cast %55 : vector<8x1x16xf32> to vector<8x16xf32>
    %57 = arith.addf %54, %56 : vector<8x16xf32>
    %c0_33 = arith.constant 0 : index
    %c0_34 = arith.constant 0 : index
    %c5 = arith.constant 5 : index
    %c0_35 = arith.constant 0 : index
    %58 = vector.load %arg8[%c0_33, %c0_34, %c5, %c0_35] : memref<1x8x16x16xf32, #tpu.memory_space<vmem>>, vector<1x8x1x16xf32>
    %59 = vector.shape_cast %58 : vector<1x8x1x16xf32> to vector<8x16xf32>
    %60 = vector.shape_cast %57 : vector<8x16xf32> to vector<1x8x1x16xf32>
    tpu.vector_store %arg8[%c0_33, %c0_34, %c5, %c0_35], %60 {strides = array<i32>} : memref<1x8x16x16xf32, #tpu.memory_space<vmem>>, vector<1x8x1x16xf32>,
    %61 = vector.extract_strided_slice %8 {offsets = [0, 96], sizes = [8, 16], strides = [1, 1]} : vector<8x256xf32> to vector<8x16xf32>
    %62 = vector.extract_strided_slice %18 {offsets = [0, 6, 0], sizes = [8, 1, 16], strides = [1, 1, 1]} : vector<8x16x16xf32> to vector<8x1x16xf32>
    %63 = vector.shape_cast %62 : vector<8x1x16xf32> to vector<8x16xf32>
    %64 = arith.addf %61, %63 : vector<8x16xf32>
    %c0_36 = arith.constant 0 : index
    %c0_37 = arith.constant 0 : index
    %c6 = arith.constant 6 : index
    %c0_38 = arith.constant 0 : index
    %65 = vector.load %arg8[%c0_36, %c0_37, %c6, %c0_38] : memref<1x8x16x16xf32, #tpu.memory_space<vmem>>, vector<1x8x1x16xf32>
    %66 = vector.shape_cast %65 : vector<1x8x1x16xf32> to vector<8x16xf32>
    %67 = vector.shape_cast %64 : vector<8x16xf32> to vector<1x8x1x16xf32>
    tpu.vector_store %arg8[%c0_36, %c0_37, %c6, %c0_38], %67 {strides = array<i32>} : memref<1x8x16x16xf32, #tpu.memory_space<vmem>>, vector<1x8x1x16xf32>,
    %68 = vector.extract_strided_slice %8 {offsets = [0, 112], sizes = [8, 16], strides = [1, 1]} : vector<8x256xf32> to vector<8x16xf32>
    %69 = vector.extract_strided_slice %18 {offsets = [0, 7, 0], sizes = [8, 1, 16], strides = [1, 1, 1]} : vector<8x16x16xf32> to vector<8x1x16xf32>
    %70 = vector.shape_cast %69 : vector<8x1x16xf32> to vector<8x16xf32>
    %71 = arith.addf %68, %70 : vector<8x16xf32>
    %c0_39 = arith.constant 0 : index
    %c0_40 = arith.constant 0 : index
    %c7 = arith.constant 7 : index
    %c0_41 = arith.constant 0 : index
    %72 = vector.load %arg8[%c0_39, %c0_40, %c7, %c0_41] : memref<1x8x16x16xf32, #tpu.memory_space<vmem>>, vector<1x8x1x16xf32>
    %73 = vector.shape_cast %72 : vector<1x8x1x16xf32> to vector<8x16xf32>
    %74 = vector.shape_cast %71 : vector<8x16xf32> to vector<1x8x1x16xf32>
    tpu.vector_store %arg8[%c0_39, %c0_40, %c7, %c0_41], %74 {strides = array<i32>} : memref<1x8x16x16xf32, #tpu.memory_space<vmem>>, vector<1x8x1x16xf32>,
    %75 = vector.extract_strided_slice %8 {offsets = [0, 128], sizes = [8, 16], strides = [1, 1]} : vector<8x256xf32> to vector<8x16xf32>
    %76 = vector.extract_strided_slice %18 {offsets = [0, 8, 0], sizes = [8, 1, 16], strides = [1, 1, 1]} : vector<8x16x16xf32> to vector<8x1x16xf32>
    %77 = vector.shape_cast %76 : vector<8x1x16xf32> to vector<8x16xf32>
    %78 = arith.addf %75, %77 : vector<8x16xf32>
    %c0_42 = arith.constant 0 : index
    %c0_43 = arith.constant 0 : index
    %c8 = arith.constant 8 : index
    %c0_44 = arith.constant 0 : index
    %79 = vector.load %arg8[%c0_42, %c0_43, %c8, %c0_44] : memref<1x8x16x16xf32, #tpu.memory_space<vmem>>, vector<1x8x1x16xf32>
    %80 = vector.shape_cast %79 : vector<1x8x1x16xf32> to vector<8x16xf32>
    %81 = vector.shape_cast %78 : vector<8x16xf32> to vector<1x8x1x16xf32>
    tpu.vector_store %arg8[%c0_42, %c0_43, %c8, %c0_44], %81 {strides = array<i32>} : memref<1x8x16x16xf32, #tpu.memory_space<vmem>>, vector<1x8x1x16xf32>,
    %82 = vector.extract_strided_slice %8 {offsets = [0, 144], sizes = [8, 16], strides = [1, 1]} : vector<8x256xf32> to vector<8x16xf32>
    %83 = vector.extract_strided_slice %18 {offsets = [0, 9, 0], sizes = [8, 1, 16], strides = [1, 1, 1]} : vector<8x16x16xf32> to vector<8x1x16xf32>
    %84 = vector.shape_cast %83 : vector<8x1x16xf32> to vector<8x16xf32>
    %85 = arith.addf %82, %84 : vector<8x16xf32>
    %c0_45 = arith.constant 0 : index
    %c0_46 = arith.constant 0 : index
    %c9 = arith.constant 9 : index
    %c0_47 = arith.constant 0 : index
    %86 = vector.load %arg8[%c0_45, %c0_46, %c9, %c0_47] : memref<1x8x16x16xf32, #tpu.memory_space<vmem>>, vector<1x8x1x16xf32>
    %87 = vector.shape_cast %86 : vector<1x8x1x16xf32> to vector<8x16xf32>
    %88 = vector.shape_cast %85 : vector<8x16xf32> to vector<1x8x1x16xf32>
    tpu.vector_store %arg8[%c0_45, %c0_46, %c9, %c0_47], %88 {strides = array<i32>} : memref<1x8x16x16xf32, #tpu.memory_space<vmem>>, vector<1x8x1x16xf32>,
    %89 = vector.extract_strided_slice %8 {offsets = [0, 160], sizes = [8, 16], strides = [1, 1]} : vector<8x256xf32> to vector<8x16xf32>
    %90 = vector.extract_strided_slice %18 {offsets = [0, 10, 0], sizes = [8, 1, 16], strides = [1, 1, 1]} : vector<8x16x16xf32> to vector<8x1x16xf32>
    %91 = vector.shape_cast %90 : vector<8x1x16xf32> to vector<8x16xf32>
    %92 = arith.addf %89, %91 : vector<8x16xf32>
    %c0_48 = arith.constant 0 : index
    %c0_49 = arith.constant 0 : index
    %c10 = arith.constant 10 : index
    %c0_50 = arith.constant 0 : index
    %93 = vector.load %arg8[%c0_48, %c0_49, %c10, %c0_50] : memref<1x8x16x16xf32, #tpu.memory_space<vmem>>, vector<1x8x1x16xf32>
    %94 = vector.shape_cast %93 : vector<1x8x1x16xf32> to vector<8x16xf32>
    %95 = vector.shape_cast %92 : vector<8x16xf32> to vector<1x8x1x16xf32>
    tpu.vector_store %arg8[%c0_48, %c0_49, %c10, %c0_50], %95 {strides = array<i32>} : memref<1x8x16x16xf32, #tpu.memory_space<vmem>>, vector<1x8x1x16xf32>,
    %96 = vector.extract_strided_slice %8 {offsets = [0, 176], sizes = [8, 16], strides = [1, 1]} : vector<8x256xf32> to vector<8x16xf32>
    %97 = vector.extract_strided_slice %18 {offsets = [0, 11, 0], sizes = [8, 1, 16], strides = [1, 1, 1]} : vector<8x16x16xf32> to vector<8x1x16xf32>
    %98 = vector.shape_cast %97 : vector<8x1x16xf32> to vector<8x16xf32>
    %99 = arith.addf %96, %98 : vector<8x16xf32>
    %c0_51 = arith.constant 0 : index
    %c0_52 = arith.constant 0 : index
    %c11 = arith.constant 11 : index
    %c0_53 = arith.constant 0 : index
    %100 = vector.load %arg8[%c0_51, %c0_52, %c11, %c0_53] : memref<1x8x16x16xf32, #tpu.memory_space<vmem>>, vector<1x8x1x16xf32>
    %101 = vector.shape_cast %100 : vector<1x8x1x16xf32> to vector<8x16xf32>
    %102 = vector.shape_cast %99 : vector<8x16xf32> to vector<1x8x1x16xf32>
    tpu.vector_store %arg8[%c0_51, %c0_52, %c11, %c0_53], %102 {strides = array<i32>} : memref<1x8x16x16xf32, #tpu.memory_space<vmem>>, vector<1x8x1x16xf32>,
    %103 = vector.extract_strided_slice %8 {offsets = [0, 192], sizes = [8, 16], strides = [1, 1]} : vector<8x256xf32> to vector<8x16xf32>
    %104 = vector.extract_strided_slice %18 {offsets = [0, 12, 0], sizes = [8, 1, 16], strides = [1, 1, 1]} : vector<8x16x16xf32> to vector<8x1x16xf32>
    %105 = vector.shape_cast %104 : vector<8x1x16xf32> to vector<8x16xf32>
    %106 = arith.addf %103, %105 : vector<8x16xf32>
    %c0_54 = arith.constant 0 : index
    %c0_55 = arith.constant 0 : index
    %c12 = arith.constant 12 : index
    %c0_56 = arith.constant 0 : index
    %107 = vector.load %arg8[%c0_54, %c0_55, %c12, %c0_56] : memref<1x8x16x16xf32, #tpu.memory_space<vmem>>, vector<1x8x1x16xf32>
    %108 = vector.shape_cast %107 : vector<1x8x1x16xf32> to vector<8x16xf32>
    %109 = vector.shape_cast %106 : vector<8x16xf32> to vector<1x8x1x16xf32>
    tpu.vector_store %arg8[%c0_54, %c0_55, %c12, %c0_56], %109 {strides = array<i32>} : memref<1x8x16x16xf32, #tpu.memory_space<vmem>>, vector<1x8x1x16xf32>,
    %110 = vector.extract_strided_slice %8 {offsets = [0, 208], sizes = [8, 16], strides = [1, 1]} : vector<8x256xf32> to vector<8x16xf32>
    %111 = vector.extract_strided_slice %18 {offsets = [0, 13, 0], sizes = [8, 1, 16], strides = [1, 1, 1]} : vector<8x16x16xf32> to vector<8x1x16xf32>
    %112 = vector.shape_cast %111 : vector<8x1x16xf32> to vector<8x16xf32>
    %113 = arith.addf %110, %112 : vector<8x16xf32>
    %c0_57 = arith.constant 0 : index
    %c0_58 = arith.constant 0 : index
    %c13 = arith.constant 13 : index
    %c0_59 = arith.constant 0 : index
    %114 = vector.load %arg8[%c0_57, %c0_58, %c13, %c0_59] : memref<1x8x16x16xf32, #tpu.memory_space<vmem>>, vector<1x8x1x16xf32>
    %115 = vector.shape_cast %114 : vector<1x8x1x16xf32> to vector<8x16xf32>
    %116 = vector.shape_cast %113 : vector<8x16xf32> to vector<1x8x1x16xf32>
    tpu.vector_store %arg8[%c0_57, %c0_58, %c13, %c0_59], %116 {strides = array<i32>} : memref<1x8x16x16xf32, #tpu.memory_space<vmem>>, vector<1x8x1x16xf32>,
    %117 = vector.extract_strided_slice %8 {offsets = [0, 224], sizes = [8, 16], strides = [1, 1]} : vector<8x256xf32> to vector<8x16xf32>
    %118 = vector.extract_strided_slice %18 {offsets = [0, 14, 0], sizes = [8, 1, 16], strides = [1, 1, 1]} : vector<8x16x16xf32> to vector<8x1x16xf32>
    %119 = vector.shape_cast %118 : vector<8x1x16xf32> to vector<8x16xf32>
    %120 = arith.addf %117, %119 : vector<8x16xf32>
    %c0_60 = arith.constant 0 : index
    %c0_61 = arith.constant 0 : index
    %c14 = arith.constant 14 : index
    %c0_62 = arith.constant 0 : index
    %121 = vector.load %arg8[%c0_60, %c0_61, %c14, %c0_62] : memref<1x8x16x16xf32, #tpu.memory_space<vmem>>, vector<1x8x1x16xf32>
    %122 = vector.shape_cast %121 : vector<1x8x1x16xf32> to vector<8x16xf32>
    %123 = vector.shape_cast %120 : vector<8x16xf32> to vector<1x8x1x16xf32>
    tpu.vector_store %arg8[%c0_60, %c0_61, %c14, %c0_62], %123 {strides = array<i32>} : memref<1x8x16x16xf32, #tpu.memory_space<vmem>>, vector<1x8x1x16xf32>,
    %124 = vector.extract_strided_slice %8 {offsets = [0, 240], sizes = [8, 16], strides = [1, 1]} : vector<8x256xf32> to vector<8x16xf32>
    %125 = vector.extract_strided_slice %18 {offsets = [0, 15, 0], sizes = [8, 1, 16], strides = [1, 1, 1]} : vector<8x16x16xf32> to vector<8x1x16xf32>
    %126 = vector.shape_cast %125 : vector<8x1x16xf32> to vector<8x16xf32>
    %127 = arith.addf %124, %126 : vector<8x16xf32>
    %c0_63 = arith.constant 0 : index
    %c0_64 = arith.constant 0 : index
    %c15 = arith.constant 15 : index
    %c0_65 = arith.constant 0 : index
    %128 = vector.load %arg8[%c0_63, %c0_64, %c15, %c0_65] : memref<1x8x16x16xf32, #tpu.memory_space<vmem>>, vector<1x8x1x16xf32>
    %129 = vector.shape_cast %128 : vector<1x8x1x16xf32> to vector<8x16xf32>
    %130 = vector.shape_cast %127 : vector<8x16xf32> to vector<1x8x1x16xf32>
    tpu.vector_store %arg8[%c0_63, %c0_64, %c15, %c0_65], %130 {strides = array<i32>} : memref<1x8x16x16xf32, #tpu.memory_space<vmem>>, vector<1x8x1x16xf32>,
    return
  }
  func.func @transform_0(%arg0: i32, %arg1: i32) -> (i32, i32, i32) {
    %c0_i32 = arith.constant 0 : i32
    %c0_i32_0 = arith.constant 0 : i32
    return %arg0, %c0_i32, %arg1 : i32, i32, i32
  }
  func.func @transform_1(%arg0: i32, %arg1: i32) -> (i32, i32, i32, i32) {
    %c0_i32 = arith.constant 0 : i32
    %c0_i32_0 = arith.constant 0 : i32
    %c0_i32_1 = arith.constant 0 : i32
    %c0_i32_2 = arith.constant 0 : i32
    return %arg0, %c0_i32, %c0_i32_0, %c0_i32_1 : i32, i32, i32, i32
  }
  func.func @transform_2(%arg0: i32, %arg1: i32) -> (i32, i32) {
    %c0_i32 = arith.constant 0 : i32
    %c0_i32_0 = arith.constant 0 : i32
    %c0_i32_1 = arith.constant 0 : i32
    return %c0_i32, %c0_i32_0 : i32, i32
  }
  func.func @transform_3(%arg0: i32, %arg1: i32) -> (i32, i32) {
    %c0_i32 = arith.constant 0 : i32
    %c0_i32_0 = arith.constant 0 : i32
    %c0_i32_1 = arith.constant 0 : i32
    return %c0_i32, %c0_i32_0 : i32, i32
  }
  func.func @transform_4(%arg0: i32, %arg1: i32) -> (i32, i32) {
    %c0_i32 = arith.constant 0 : i32
    %c0_i32_0 = arith.constant 0 : i32
    return %arg1, %c0_i32 : i32, i32
  }
  func.func @transform_5(%arg0: i32, %arg1: i32) -> (i32, i32) {
    %c0_i32 = arith.constant 0 : i32
    %c0_i32_0 = arith.constant 0 : i32
    %c0_i32_1 = arith.constant 0 : i32
    return %c0_i32, %c0_i32_0 : i32, i32
  }
  func.func @transform_6(%arg0: i32, %arg1: i32) -> (i32, i32, i32, i32) {
    %c0_i32 = arith.constant 0 : i32
    %c0_i32_0 = arith.constant 0 : i32
    %c0_i32_1 = arith.constant 0 : i32
    return %arg0, %c0_i32, %arg1, %c0_i32_0 : i32, i32, i32, i32
  }
}

</mosaic_0001>

<llo_original>
// kernel: local_up_forward.1
$region0: #{local_up_forward.1}
  #allocation0 [shape = 'u32[]', space=smem, size = 0x4, offset = 0x4, fixed_abs, tag = 'smem constant byte address 0x4 - core index']
  #allocation1 [shape = 'u32[72,128]{1,0:T(1,128)}', space=vmem, size = 0x9000, scoped, tag = 'internal scratch']
  %s0 = inlined_call_operand.vmem [shape: f32[2,4,256], index: 0, kind: input, shape index: {}]
  %s1 = inlined_call_operand.vmem [shape: f32[2,8,8,8], index: 1, kind: input, shape index: {}]
  %s2 = inlined_call_operand.vmem [shape: f32[8,4], index: 2, kind: input, shape index: {}]
  %s3 = inlined_call_operand.vmem [shape: f32[8,1], index: 3, kind: input, shape index: {}]
  %s4 = inlined_call_operand.vmem [shape: f32[16,8], index: 4, kind: input, shape index: {}, may-alias: {4,5}]
  %s5 = inlined_call_operand.vmem [shape: f32[16,8], index: 5, kind: input, shape index: {}, may-alias: {4,5}]
  %s6 = inlined_call_operand.hbm [shape: f32[2,8,16,16], index: 6, kind: output, shape index: {}]
  %s7 = sld [smem:[#allocation0]]
  $region57: #{local_up_forward.1} parent=0
    _
  %s9 = ssub.s32 1, %s7
  %s10 = scalar_select 0, %s9, %s7
  $region1: #{local_up_forward.1} parent=0
    #allocation2 [shape = 'u8[131072]{0}', space=vmem, size = 0x20000, scoped, tag = 'output window, operand 0']
    #allocation3 [shape = 's32[2]{0}', space=sflag, size = 0x8, scoped, tag = 'scoped memory for local_up_forward.1']
    %11 = vsyncpa [#allocation3], 0
    %s12 = scalar_lea.sflag [#allocation3], 1
    %13 = vsyncpa %s12, 0
    loop: start=0, step=1, limit=4
    $region2: #{local_up_forward.1} parent=1 // loop_pre_header
      _
    $region3: #{local_up_forward.1} parent=1 // loop_header
      %s15 = sphi 0, %s19
      %p16 = scmp.ge.s32.totalorder %s15, 4
      %s22 = sphi 0, %s34
      %s23 = sphi 0, %s30
      %s24 = sphi 0, %s22
      %s25 = sphi 0, %s23
      %s26 = sphi 0, %s24
      %s27 = sphi 0, %s25
      %s39 = sphi 0, %s41
      %s42 = sphi 0, %s39
      %s43 = sphi 0, %s42
      %s59 = sphi 0, %s43
      %s65 = sphi 0, %s67
      %s68 = sphi 0, %s65
      %s69 = sphi 0, %s68
      %s85 = sphi 0, %s69
      %s89 = sphi 0, %s89
      %s91 = sphi 0, %s89
      %s92 = sphi 0, %s91
      %s106 = sphi 0, %s92
      %s110 = sphi 0, %s110
      %s112 = sphi 0, %s110
      %s113 = sphi 0, %s112
      %s127 = sphi 0, %s113
      %s133 = sphi 0, %s135
      %s136 = sphi 0, %s133
      %s137 = sphi 0, %s136
      %s153 = sphi 0, %s137
      %s157 = sphi 0, %s157
      %s159 = sphi 0, %s157
      %s160 = sphi 0, %s159
      %s174 = sphi 0, %s160
      %s182 = sphi 0, %s184
      %s185 = sphi 0, %s182
      %s186 = sphi 0, %s185
      %s202 = sphi 0, %s186
    $region4: #{local_up_forward.1} parent=1 // loop_header_branch
      %18 = sbr.rel (%p16) target = $region8
    $region5: #{local_up_forward.1} parent=1 // loop_body
      %s20 = ssub.s32 %s15, 1
      %s21 = ssub.s32 %s15, 2
      %s28 = sadd.s32 1, %s23
      %p29 = scmp.ge.s32.totalorder %s28, 1
      %s30 = scalar_select %p29, 0, %s28
      %s31 = sadd.s32 1, %s22
      %s32 = scalar_select %p29, %s31, %s22
      %p33 = scmp.ge.s32.totalorder %s32, 2
      %s34 = scalar_select %p33, 0, %s32
      %s35 = ssub.s32 %s22, %s34
      %s36 = ssub.s32 %s23, %s30
      %s37 = sor.u32 %s35, %s36
      %p38 = scmp.eq.s32.totalorder %s37, 0
      %s40 = sadd.s32 %s39, 1
      %s41 = scalar_select %p38, %s39, %s40
      %p44 = pneg %p38
      %p45 = scmp.eq.s32.totalorder %s15, 1
      %p46 = por %p44, %p45
      %p47 = scmp.ne.s32.totalorder %s39, %s42
      %p48 = scmp.eq.s32.totalorder %s15, 0
      %p49 = por %p47, %p48
      %p50 = scmp.ne.s32.totalorder %s39, %s42
      %p51 = scmp.eq.s32.totalorder %s20, 1
      %p52 = por %p50, %p51
      %p53 = scmp.ne.s32.totalorder %s42, %s43
      %p54 = scmp.eq.s32.totalorder %s20, 0
      %p55 = por %p53, %p54
      %p56 = scmp.ne.s32.totalorder %s42, %s43
      %p57 = scmp.eq.s32.totalorder %s21, 1
      %p58 = por %p56, %p57
      %p60 = scmp.ne.s32.totalorder %s43, %s59
      %p61 = scmp.eq.s32.totalorder %s21, 0
      %p62 = por %p60, %p61
      %s63 = ssub.s32 %s22, %s34
      %p64 = scmp.eq.s32.totalorder %s63, 0
      %s66 = sadd.s32 %s65, 1
      %s67 = scalar_select %p64, %s65, %s66
      %p70 = pneg %p64
      %p71 = scmp.eq.s32.totalorder %s15, 1
      %p72 = por %p70, %p71
      %p73 = scmp.ne.s32.totalorder %s65, %s68
      %p74 = scmp.eq.s32.totalorder %s15, 0
      %p75 = por %p73, %p74
      %p76 = scmp.ne.s32.totalorder %s65, %s68
      %p77 = scmp.eq.s32.totalorder %s20, 1
      %p78 = por %p76, %p77
      %p79 = scmp.ne.s32.totalorder %s68, %s69
      %p80 = scmp.eq.s32.totalorder %s20, 0
      %p81 = por %p79, %p80
      %p82 = scmp.ne.s32.totalorder %s68, %s69
      %p83 = scmp.eq.s32.totalorder %s21, 1
      %p84 = por %p82, %p83
      %p86 = scmp.ne.s32.totalorder %s69, %s85
      %p87 = scmp.eq.s32.totalorder %s21, 0
      %p88 = por %p86, %p87
      %s90 = sadd.s32 %s89, 1
      %p93 = scmp.eq.s32.totalorder %s15, 1
      %p94 = scmp.ne.s32.totalorder %s89, %s91
      %p95 = scmp.eq.s32.totalorder %s15, 0
      %p96 = por %p94, %p95
      %p97 = scmp.ne.s32.totalorder %s89, %s91
      %p98 = scmp.eq.s32.totalorder %s20, 1
      %p99 = por %p97, %p98
      %p100 = scmp.ne.s32.totalorder %s91, %s92
      %p101 = scmp.eq.s32.totalorder %s20, 0
      %p102 = por %p100, %p101
      %p103 = scmp.ne.s32.totalorder %s91, %s92
      %p104 = scmp.eq.s32.totalorder %s21, 1
      %p105 = por %p103, %p104
      %p107 = scmp.ne.s32.totalorder %s92, %s106
      %p108 = scmp.eq.s32.totalorder %s21, 0
      %p109 = por %p107, %p108
      %s111 = sadd.s32 %s110, 1
      %p114 = scmp.eq.s32.totalorder %s15, 1
      %p115 = scmp.ne.s32.totalorder %s110, %s112
      %p116 = scmp.eq.s32.totalorder %s15, 0
      %p117 = por %p115, %p116
      %p118 = scmp.ne.s32.totalorder %s110, %s112
      %p119 = scmp.eq.s32.totalorder %s20, 1
      %p120 = por %p118, %p119
      %p121 = scmp.ne.s32.totalorder %s112, %s113
      %p122 = scmp.eq.s32.totalorder %s20, 0
      %p123 = por %p121, %p122
      %p124 = scmp.ne.s32.totalorder %s112, %s113
      %p125 = scmp.eq.s32.totalorder %s21, 1
      %p126 = por %p124, %p125
      %p128 = scmp.ne.s32.totalorder %s113, %s127
      %p129 = scmp.eq.s32.totalorder %s21, 0
      %p130 = por %p128, %p129
      %s131 = ssub.s32 %s23, %s30
      %p132 = scmp.eq.s32.totalorder %s131, 0
      %s134 = sadd.s32 %s133, 1
      %s135 = scalar_select %p132, %s133, %s134
      %p138 = pneg %p132
      %p139 = scmp.eq.s32.totalorder %s15, 1
      %p140 = por %p138, %p139
      %p141 = scmp.ne.s32.totalorder %s133, %s136
      %p142 = scmp.eq.s32.totalorder %s15, 0
      %p143 = por %p141, %p142
      %p144 = scmp.ne.s32.totalorder %s133, %s136
      %p145 = scmp.eq.s32.totalorder %s20, 1
      %p146 = por %p144, %p145
      %p147 = scmp.ne.s32.totalorder %s136, %s137
      %p148 = scmp.eq.s32.totalorder %s20, 0
      %p149 = por %p147, %p148
      %p150 = scmp.ne.s32.totalorder %s136, %s137
      %p151 = scmp.eq.s32.totalorder %s21, 1
      %p152 = por %p150, %p151
      %p154 = scmp.ne.s32.totalorder %s137, %s153
      %p155 = scmp.eq.s32.totalorder %s21, 0
      %p156 = por %p154, %p155
      %s158 = sadd.s32 %s157, 1
      %p161 = scmp.eq.s32.totalorder %s15, 1
      %p162 = scmp.ne.s32.totalorder %s157, %s159
      %p163 = scmp.eq.s32.totalorder %s15, 0
      %p164 = por %p162, %p163
      %p165 = scmp.ne.s32.totalorder %s157, %s159
      %p166 = scmp.eq.s32.totalorder %s20, 1
      %p167 = por %p165, %p166
      %p168 = scmp.ne.s32.totalorder %s159, %s160
      %p169 = scmp.eq.s32.totalorder %s20, 0
      %p170 = por %p168, %p169
      %p171 = scmp.ne.s32.totalorder %s159, %s160
      %p172 = scmp.eq.s32.totalorder %s21, 1
      %p173 = por %p171, %p172
      %p175 = scmp.ne.s32.totalorder %s160, %s174
      %p176 = scmp.eq.s32.totalorder %s21, 0
      %p177 = por %p175, %p176
      %s178 = ssub.s32 %s22, %s34
      %s179 = ssub.s32 %s23, %s30
      %s180 = sor.u32 %s178, %s179
      %p181 = scmp.eq.s32.totalorder %s180, 0
      %s183 = sadd.s32 %s182, 1
      %s184 = scalar_select %p181, %s182, %s183
      %p187 = pneg %p181
      %p188 = scmp.eq.s32.totalorder %s15, 1
      %p189 = por %p187, %p188
      %p190 = scmp.ne.s32.totalorder %s182, %s185
      %p191 = scmp.eq.s32.totalorder %s15, 0
      %p192 = por %p190, %p191
      %p193 = scmp.ne.s32.totalorder %s182, %s185
      %p194 = scmp.eq.s32.totalorder %s20, 1
      %p195 = por %p193, %p194
      %p196 = scmp.ne.s32.totalorder %s185, %s186
      %p197 = scmp.eq.s32.totalorder %s20, 0
      %p198 = por %p196, %p197
      %p199 = scmp.ne.s32.totalorder %s185, %s186
      %p200 = scmp.eq.s32.totalorder %s21, 1
      %p201 = por %p199, %p200
      %p203 = scmp.ne.s32.totalorder %s186, %s202
      %p204 = scmp.eq.s32.totalorder %s21, 0
      %p205 = por %p203, %p204
      %p206 = scmp.le.s32.totalorder 1, %s15
      %p207 = scmp.lt.s32.totalorder %s15, 3
      %p208 = pnand %p206, %p207
      %p209 = pneg %p208
      // Predicated region
      $region9: #{local_up_forward.1} parent=5 // pred_check
        _
      $region10: #{local_up_forward.1} parent=5 // pred_check_branch
        %211 = sbr.rel (%p208) target = $region12
      $region11: #{local_up_forward.1} parent=5 // pred_region
        %s212 = ssub.s32 %s15, 1
        // Predicated region
        $region13: #{local_up_forward.1} parent=11 // pred_check
          %p213 = pneg %p102
        $region14: #{local_up_forward.1} parent=11 // pred_check_branch
          %215 = sbr.rel (%p213) target = $region16
        $region15: #{local_up_forward.1} parent=11 // pred_region
          _
        $region16: #{local_up_forward.1} parent=11 // pred_fallthru
          _
        // Predicated region
        $region17: #{local_up_forward.1} parent=11 // pred_check
          %p216 = pneg %p123
        $region18: #{local_up_forward.1} parent=11 // pred_check_branch
          %218 = sbr.rel (%p216) target = $region20
        $region19: #{local_up_forward.1} parent=11 // pred_region
          _
        $region20: #{local_up_forward.1} parent=11 // pred_fallthru
          _
        // Predicated region
        $region21: #{local_up_forward.1} parent=11 // pred_check
          %p219 = pneg %p149
        $region22: #{local_up_forward.1} parent=11 // pred_check_branch
          %221 = sbr.rel (%p219) target = $region24
        $region23: #{local_up_forward.1} parent=11 // pred_region
          %s222 = smul.u32 2, %s25
          %p223 = scmp.lt.s32.totalorder %s222, 1
          %s224 = scalar_select %p223, %s222, 1
          %s225 = smul.addr %s224, 8
          %s226 = scalar_lea.vmem %s4, %s225
          %s227 = smul.u32 2, %s25
        $region24: #{local_up_forward.1} parent=11 // pred_fallthru
          _
        // Predicated region
        $region25: #{local_up_forward.1} parent=11 // pred_check
          %p228 = pneg %p170
        $region26: #{local_up_forward.1} parent=11 // pred_check_branch
          %230 = sbr.rel (%p228) target = $region28
        $region27: #{local_up_forward.1} parent=11 // pred_region
          _
        $region28: #{local_up_forward.1} parent=11 // pred_fallthru
          _
      $region12: #{local_up_forward.1} parent=5 // pred_fallthru
        _
      %p231 = scmp.lt.s32.totalorder %s15, 2
      // Predicated region
      $region29: #{local_up_forward.1} parent=5 // pred_check
        %p232 = pneg %p231
      $region30: #{local_up_forward.1} parent=5 // pred_check_branch
        %234 = sbr.rel (%p232) target = $region32
      $region31: #{local_up_forward.1} parent=5 // pred_region
        // Predicated region
        $region33: #{local_up_forward.1} parent=31 // pred_check
          %p235 = pneg %p49
        $region34: #{local_up_forward.1} parent=31 // pred_check_branch
          %237 = sbr.rel (%p235) target = $region36
        $region35: #{local_up_forward.1} parent=31 // pred_region
          %s238 = smul.u32 2, %s23
          %p239 = scmp.lt.s32.totalorder %s22, 1
          %s240 = scalar_select %p239, %s22, 1
          %p241 = scmp.lt.s32.totalorder %s238, 1
          %s242 = scalar_select %p241, %s238, 1
          %s243 = smul.addr %s240, 2
          %s244 = sadd.s32 %s242, %s243
          %s245 = smul.addr %s244, 4
          %s246 = scalar_lea.vmem %s0, %s245
          %s247 = smul.u32 2, %s23
        $region36: #{local_up_forward.1} parent=31 // pred_fallthru
          _
        // Predicated region
        $region37: #{local_up_forward.1} parent=31 // pred_check
          %p248 = pneg %p75
        $region38: #{local_up_forward.1} parent=31 // pred_check_branch
          %250 = sbr.rel (%p248) target = $region40
        $region39: #{local_up_forward.1} parent=31 // pred_region
          %p251 = scmp.lt.s32.totalorder %s22, 1
          %s252 = scalar_select %p251, %s22, 1
          %s253 = smul.addr %s252, 8
          %s254 = smul.addr %s253, 8
          %s255 = scalar_lea.vmem %s1, %s254
        $region40: #{local_up_forward.1} parent=31 // pred_fallthru
          _
      $region32: #{local_up_forward.1} parent=5 // pred_fallthru
        _
      %p256 = scmp.le.s32.totalorder 1, %s15
      %p257 = scmp.lt.s32.totalorder %s15, 3
      %p258 = pnand %p256, %p257
      %p259 = pneg %p258
      // Predicated region
      $region41: #{local_up_forward.1} parent=5 // pred_check
        _
      $region42: #{local_up_forward.1} parent=5 // pred_check_branch
        %261 = sbr.rel (%p258) target = $region44
      $region43: #{local_up_forward.1} parent=5 // pred_region
        %s262 = ssub.s32 %s15, 1
        %s263 = smul.u32 2, %s25
        %p264 = scmp.lt.s32.totalorder %s24, 1
        %s265 = scalar_select %p264, %s24, 1
        %p266 = scmp.lt.s32.totalorder %s263, 1
        %s267 = scalar_select %p266, %s263, 1
        %s268 = smul.addr %s265, 2
        %s269 = sadd.s32 %s267, %s268
        %s270 = smul.addr %s269, 4
        %s271 = scalar_lea.vmem %s0, %s270
        %p272 = pneg %p55
        %p273 = pneg %p52
        %p274 = scmp.lt.s32.totalorder %s24, 1
        %s275 = scalar_select %p274, %s24, 1
        %s276 = smul.addr %s275, 8
        %s277 = smul.addr %s276, 8
        %s278 = scalar_lea.vmem %s1, %s277
        %p279 = pneg %p81
        %p280 = pneg %p78
        %p281 = pneg %p102
        %p282 = pneg %p99
        %p283 = pneg %p123
        %p284 = pneg %p120
        %s285 = smul.u32 2, %s25
        %p286 = scmp.lt.s32.totalorder %s285, 1
        %s287 = scalar_select %p286, %s285, 1
        %s288 = smul.addr %s287, 8
        %s289 = scalar_lea.vmem %s4, %s288
        %p290 = pneg %p149
        %p291 = pneg %p146
        %p292 = pneg %p170
        %p293 = pneg %p167
        %p294 = pneg %p198
        %p295 = pneg %p195
        %s296 = sand.u32 %s185, 1
        %s297 = scalar_lea.sflag [#allocation3], %s296
        %s298 = sand.u32 %s185, 1
        %s299 = smul.addr %s298, 128
        %s300 = scalar_lea.vmem [#allocation2], %s299
        %s301 = smul.u32 2, %s25
        %p302 = scmp.lt.s32.totalorder %s24, 1
        %s303 = scalar_select %p302, %s24, 1
        %p304 = scmp.lt.s32.totalorder %s301, 1
        %s305 = scalar_select %p304, %s301, 1
        %s306 = smul.addr %s303, 2
        %s307 = sadd.s32 %s305, %s306
        %s308 = smul.addr %s307, 4
        %s309 = scalar_lea.vmem %s0, %s308
        %s310 = smul.u32 2, %s25
        %p311 = scmp.lt.s32.totalorder %s24, 1
        %s312 = scalar_select %p311, %s24, 1
        %s313 = smul.addr %s312, 8
        %s314 = smul.addr %s313, 8
        %s315 = scalar_lea.vmem %s1, %s314
        %s316 = smul.u32 2, %s25
        %p317 = scmp.lt.s32.totalorder %s316, 1
        %s318 = scalar_select %p317, %s316, 1
        %s319 = smul.addr %s318, 8
        %s320 = scalar_lea.vmem %s4, %s319
        %s321 = smul.u32 2, %s25
        %s322 = smul.u32 2, %s25
        %v323 = vld [vmem:[%s309] sm:$0xff]
        %v324 = vld [vmem:[%s2] sm:$0xff]
        %v325 = vld [vmem:[%s3] sm:$0xff]
        %327 = vset.pattern.permute.xlu0 0
        %328 = vperm.xlu0 %327, %v325
        %v329 = vpop.permute.xlu0 %328
        %332 = vst [vmem:[#allocation1] ss:$2 sm:$0xff] %v323
        %v333 = vld.sshfl [vmem:[#allocation1] sm:$0xff pattern:$0x75316420]
        %v334 = vld.sshfl [vmem:[#allocation1 + $0x8] sm:$0xff pattern:$0x75316420]
        %vm335 = vcmask 31744
        %v337 = vsel %vm335, %v324, 0
        %vm339 = vcmask 1043456
        %v340 = vsel %vm339, %v333, 0
        %v342 = vsel %vm339, %v334, 0
        %344 = vmatpush.msra.mxu0 0.0
        %345 = vmatpush.msra.mxu0 0.0
        %346 = vmatpush.msra.mxu0 0.0
        %347 = vmatpush.msra.mxu0 0.0
        %348 = vmatpush.msra.mxu0 0.0
        %349 = vmatpush.msra.mxu0 0.0
        %350 = vmatpush.msra.mxu0 0.0
        %351 = vmatpush.msra.mxu0 0.0
        %352 = vmatpush.msra.mxu0 0.0
        %353 = vmatpush.msra.mxu0 0.0
        %354 = vmatpush.msra.mxu0 0.0
        %355 = vmatpush.msra.mxu0 0.0
        %356 = vmatpush.msra.mxu0 0.0
        %357 = vmatpush.msra.mxu0 0.0
        %358 = vmatpush.msra.mxu0 0.0
        %359 = vmatpush.msra.mxu0 %v340
        %360 = vmatmul.f32.gmra.mxu0 %v337
        %v361 = vpop.f32.mrf.mxu0
        %v362 = vadd.f32 %v329, %v361
        %363 = vdwg.mxu0
        %364 = vmatpush.msra.mxu0 0.0
        %365 = vmatpush.msra.mxu0 0.0
        %366 = vmatpush.msra.mxu0 0.0
        %367 = vmatpush.msra.mxu0 0.0
        %368 = vmatpush.msra.mxu0 0.0
        %369 = vmatpush.msra.mxu0 0.0
        %370 = vmatpush.msra.mxu0 0.0
        %371 = vmatpush.msra.mxu0 0.0
        %372 = vmatpush.msra.mxu0 0.0
        %373 = vmatpush.msra.mxu0 0.0
        %374 = vmatpush.msra.mxu0 0.0
        %375 = vmatpush.msra.mxu0 0.0
        %376 = vmatpush.msra.mxu0 0.0
        %377 = vmatpush.msra.mxu0 0.0
        %378 = vmatpush.msra.mxu0 0.0
        %379 = vmatpush.msra.mxu0 %v342
        %380 = vmatmul.f32.gmra.mxu0 %v337
        %v381 = vpop.f32.mrf.mxu0
        %v382 = vadd.f32 %v329, %v381
        %383 = vdwg.mxu0
        %v384 = vmax.f32 %v362, 0.0
        %v385 = vmax.f32 %v382, 0.0
        %v386 = vld [vmem:[%s315] sm:$0xff]
        %v387 = vld [vmem:[%s315 + $0x8] sm:$0xff]
        %v388 = vld [vmem:[%s315 + $0x10] sm:$0xff]
        %v389 = vld [vmem:[%s315 + $0x18] sm:$0xff]
        %v390 = vld [vmem:[%s315 + $0x20] sm:$0xff]
        %v391 = vld [vmem:[%s315 + $0x28] sm:$0xff]
        %v392 = vld [vmem:[%s315 + $0x30] sm:$0xff]
        %v393 = vld [vmem:[%s315 + $0x38] sm:$0xff]
        %v394 = vld [vmem:[%s5] sm:$0xff]
        %v395 = vld [vmem:[%s5 + $0x8] sm:$0xff]
        %vm396 = vcmask 64512
        %v398 = vsel %vm396, %v386, 0
        %v401 = vsel %vm396, %v394, 0
        %v404 = vsel %vm396, %v395, 0
        %406 = vmatpush.xpose.msra.mxu0 0.0
        %407 = vmatpush.xpose.msra.mxu0 0.0
        %408 = vmatpush.xpose.msra.mxu0 0.0
        %409 = vmatpush.xpose.msra.mxu0 0.0
        %410 = vmatpush.xpose.msra.mxu0 0.0
        %411 = vmatpush.xpose.msra.mxu0 0.0
        %412 = vmatpush.xpose.msra.mxu0 0.0
        %413 = vmatpush.xpose.msra.mxu0 0.0
        %414 = vmatpush.xpose.msra.mxu0 0.0
        %415 = vmatpush.xpose.msra.mxu0 0.0
        %416 = vmatpush.xpose.msra.mxu0 0.0
        %417 = vmatpush.xpose.msra.mxu0 0.0
        %418 = vmatpush.xpose.msra.mxu0 0.0
        %419 = vmatpush.xpose.msra.mxu0 0.0
        %420 = vmatpush.xpose.msra.mxu0 %v404
        %421 = vmatpush.xpose.msra.mxu0 %v401
        %422 = vmatmul.f32.gmra.mxu0 %v398
        %v423 = vpop.f32.mrf.mxu0
        %v424 = vadd.f32 0.0, %v423
        %425 = vdwg.mxu0
        %v427 = vsel %vm396, %v387, 0
        %429 = vmatpush.xpose.msra.mxu0 0.0
        %430 = vmatpush.xpose.msra.mxu0 0.0
        %431 = vmatpush.xpose.msra.mxu0 0.0
        %432 = vmatpush.xpose.msra.mxu0 0.0
        %433 = vmatpush.xpose.msra.mxu0 0.0
        %434 = vmatpush.xpose.msra.mxu0 0.0
        %435 = vmatpush.xpose.msra.mxu0 0.0
        %436 = vmatpush.xpose.msra.mxu0 0.0
        %437 = vmatpush.xpose.msra.mxu0 0.0
        %438 = vmatpush.xpose.msra.mxu0 0.0
        %439 = vmatpush.xpose.msra.mxu0 0.0
        %440 = vmatpush.xpose.msra.mxu0 0.0
        %441 = vmatpush.xpose.msra.mxu0 0.0
        %442 = vmatpush.xpose.msra.mxu0 0.0
        %443 = vmatpush.xpose.msra.mxu0 %v404
        %444 = vmatpush.xpose.msra.mxu0 %v401
        %445 = vmatmul.f32.gmra.mxu0 %v427
        %v446 = vpop.f32.mrf.mxu0
        %v447 = vadd.f32 0.0, %v446
        %448 = vdwg.mxu0
        %v450 = vsel %vm396, %v388, 0
        %452 = vmatpush.xpose.msra.mxu0 0.0
        %453 = vmatpush.xpose.msra.mxu0 0.0
        %454 = vmatpush.xpose.msra.mxu0 0.0
        %455 = vmatpush.xpose.msra.mxu0 0.0
        %456 = vmatpush.xpose.msra.mxu0 0.0
        %457 = vmatpush.xpose.msra.mxu0 0.0
        %458 = vmatpush.xpose.msra.mxu0 0.0
        %459 = vmatpush.xpose.msra.mxu0 0.0
        %460 = vmatpush.xpose.msra.mxu0 0.0
        %461 = vmatpush.xpose.msra.mxu0 0.0
        %462 = vmatpush.xpose.msra.mxu0 0.0
        %463 = vmatpush.xpose.msra.mxu0 0.0
        %464 = vmatpush.xpose.msra.mxu0 0.0
        %465 = vmatpush.xpose.msra.mxu0 0.0
        %466 = vmatpush.xpose.msra.mxu0 %v404
        %467 = vmatpush.xpose.msra.mxu0 %v401
        %468 = vmatmul.f32.gmra.mxu0 %v450
        %v469 = vpop.f32.mrf.mxu0
        %v470 = vadd.f32 0.0, %v469
        %471 = vdwg.mxu0
        %v473 = vsel %vm396, %v389, 0
        %475 = vmatpush.xpose.msra.mxu0 0.0
        %476 = vmatpush.xpose.msra.mxu0 0.0
        %477 = vmatpush.xpose.msra.mxu0 0.0
        %478 = vmatpush.xpose.msra.mxu0 0.0
        %479 = vmatpush.xpose.msra.mxu0 0.0
        %480 = vmatpush.xpose.msra.mxu0 0.0
        %481 = vmatpush.xpose.msra.mxu0 0.0
        %482 = vmatpush.xpose.msra.mxu0 0.0
        %483 = vmatpush.xpose.msra.mxu0 0.0
        %484 = vmatpush.xpose.msra.mxu0 0.0
        %485 = vmatpush.xpose.msra.mxu0 0.0
        %486 = vmatpush.xpose.msra.mxu0 0.0
        %487 = vmatpush.xpose.msra.mxu0 0.0
        %488 = vmatpush.xpose.msra.mxu0 0.0
        %489 = vmatpush.xpose.msra.mxu0 %v404
        %490 = vmatpush.xpose.msra.mxu0 %v401
        %491 = vmatmul.f32.gmra.mxu0 %v473
        %v492 = vpop.f32.mrf.mxu0
        %v493 = vadd.f32 0.0, %v492
        %494 = vdwg.mxu0
        %v496 = vsel %vm396, %v390, 0
        %498 = vmatpush.xpose.msra.mxu0 0.0
        %499 = vmatpush.xpose.msra.mxu0 0.0
        %500 = vmatpush.xpose.msra.mxu0 0.0
        %501 = vmatpush.xpose.msra.mxu0 0.0
        %502 = vmatpush.xpose.msra.mxu0 0.0
        %503 = vmatpush.xpose.msra.mxu0 0.0
        %504 = vmatpush.xpose.msra.mxu0 0.0
        %505 = vmatpush.xpose.msra.mxu0 0.0
        %506 = vmatpush.xpose.msra.mxu0 0.0
        %507 = vmatpush.xpose.msra.mxu0 0.0
        %508 = vmatpush.xpose.msra.mxu0 0.0
        %509 = vmatpush.xpose.msra.mxu0 0.0
        %510 = vmatpush.xpose.msra.mxu0 0.0
        %511 = vmatpush.xpose.msra.mxu0 0.0
        %512 = vmatpush.xpose.msra.mxu0 %v404
        %513 = vmatpush.xpose.msra.mxu0 %v401
        %514 = vmatmul.f32.gmra.mxu0 %v496
        %v515 = vpop.f32.mrf.mxu0
        %v516 = vadd.f32 0.0, %v515
        %517 = vdwg.mxu0
        %v519 = vsel %vm396, %v391, 0
        %521 = vmatpush.xpose.msra.mxu0 0.0
        %522 = vmatpush.xpose.msra.mxu0 0.0
        %523 = vmatpush.xpose.msra.mxu0 0.0
        %524 = vmatpush.xpose.msra.mxu0 0.0
        %525 = vmatpush.xpose.msra.mxu0 0.0
        %526 = vmatpush.xpose.msra.mxu0 0.0
        %527 = vmatpush.xpose.msra.mxu0 0.0
        %528 = vmatpush.xpose.msra.mxu0 0.0
        %529 = vmatpush.xpose.msra.mxu0 0.0
        %530 = vmatpush.xpose.msra.mxu0 0.0
        %531 = vmatpush.xpose.msra.mxu0 0.0
        %532 = vmatpush.xpose.msra.mxu0 0.0
        %533 = vmatpush.xpose.msra.mxu0 0.0
        %534 = vmatpush.xpose.msra.mxu0 0.0
        %535 = vmatpush.xpose.msra.mxu0 %v404
        %536 = vmatpush.xpose.msra.mxu0 %v401
        %537 = vmatmul.f32.gmra.mxu0 %v519
        %v538 = vpop.f32.mrf.mxu0
        %v539 = vadd.f32 0.0, %v538
        %540 = vdwg.mxu0
        %v542 = vsel %vm396, %v392, 0
        %544 = vmatpush.xpose.msra.mxu0 0.0
        %545 = vmatpush.xpose.msra.mxu0 0.0
        %546 = vmatpush.xpose.msra.mxu0 0.0
        %547 = vmatpush.xpose.msra.mxu0 0.0
        %548 = vmatpush.xpose.msra.mxu0 0.0
        %549 = vmatpush.xpose.msra.mxu0 0.0
        %550 = vmatpush.xpose.msra.mxu0 0.0
        %551 = vmatpush.xpose.msra.mxu0 0.0
        %552 = vmatpush.xpose.msra.mxu0 0.0
        %553 = vmatpush.xpose.msra.mxu0 0.0
        %554 = vmatpush.xpose.msra.mxu0 0.0
        %555 = vmatpush.xpose.msra.mxu0 0.0
        %556 = vmatpush.xpose.msra.mxu0 0.0
        %557 = vmatpush.xpose.msra.mxu0 0.0
        %558 = vmatpush.xpose.msra.mxu0 %v404
        %559 = vmatpush.xpose.msra.mxu0 %v401
        %560 = vmatmul.f32.gmra.mxu0 %v542
        %v561 = vpop.f32.mrf.mxu0
        %v562 = vadd.f32 0.0, %v561
        %563 = vdwg.mxu0
        %v565 = vsel %vm396, %v393, 0
        %567 = vmatpush.xpose.msra.mxu0 0.0
        %568 = vmatpush.xpose.msra.mxu0 0.0
        %569 = vmatpush.xpose.msra.mxu0 0.0
        %570 = vmatpush.xpose.msra.mxu0 0.0
        %571 = vmatpush.xpose.msra.mxu0 0.0
        %572 = vmatpush.xpose.msra.mxu0 0.0
        %573 = vmatpush.xpose.msra.mxu0 0.0
        %574 = vmatpush.xpose.msra.mxu0 0.0
        %575 = vmatpush.xpose.msra.mxu0 0.0
        %576 = vmatpush.xpose.msra.mxu0 0.0
        %577 = vmatpush.xpose.msra.mxu0 0.0
        %578 = vmatpush.xpose.msra.mxu0 0.0
        %579 = vmatpush.xpose.msra.mxu0 0.0
        %580 = vmatpush.xpose.msra.mxu0 0.0
        %581 = vmatpush.xpose.msra.mxu0 %v404
        %582 = vmatpush.xpose.msra.mxu0 %v401
        %583 = vmatmul.f32.gmra.mxu0 %v565
        %v584 = vpop.f32.mrf.mxu0
        %v585 = vadd.f32 0.0, %v584
        %586 = vdwg.mxu0
        %v587 = vld [vmem:[%s320] sm:$0xff]
        %v588 = vld [vmem:[%s320 + $0x8] sm:$0xff]
        %v590 = vsel %vm396, %v587, 0
        %v593 = vsel %vm396, %v588, 0
        %595 = vmatpush.msra.mxu0 0.0
        %596 = vmatpush.msra.mxu0 0.0
        %597 = vmatpush.msra.mxu0 0.0
        %598 = vmatpush.msra.mxu0 0.0
        %599 = vmatpush.msra.mxu0 0.0
        %600 = vmatpush.msra.mxu0 0.0
        %601 = vmatpush.msra.mxu0 0.0
        %602 = vmatpush.msra.mxu0 0.0
        %603 = vmatpush.msra.mxu0 0.0
        %604 = vmatpush.msra.mxu0 0.0
        %605 = vmatpush.msra.mxu0 0.0
        %606 = vmatpush.msra.mxu0 0.0
        %607 = vmatpush.msra.mxu0 0.0
        %608 = vmatpush.msra.mxu0 0.0
        %609 = vmatpush.msra.mxu0 0.0
        %610 = vmatpush.msra.mxu0 %v424
        %611 = vmatmul.f32.gmra.mxu0 %v590
        %v612 = vpop.f32.mrf.mxu0
        %v613 = vadd.f32 0.0, %v612
        %614 = vmatmul.f32.gmra.mxu0 %v593
        %v615 = vpop.f32.mrf.mxu0
        %v616 = vadd.f32 0.0, %v615
        %617 = vdwg.mxu0
        %618 = vmatpush.msra.mxu0 0.0
        %619 = vmatpush.msra.mxu0 0.0
        %620 = vmatpush.msra.mxu0 0.0
        %621 = vmatpush.msra.mxu0 0.0
        %622 = vmatpush.msra.mxu0 0.0
        %623 = vmatpush.msra.mxu0 0.0
        %624 = vmatpush.msra.mxu0 0.0
        %625 = vmatpush.msra.mxu0 0.0
        %626 = vmatpush.msra.mxu0 0.0
        %627 = vmatpush.msra.mxu0 0.0
        %628 = vmatpush.msra.mxu0 0.0
        %629 = vmatpush.msra.mxu0 0.0
        %630 = vmatpush.msra.mxu0 0.0
        %631 = vmatpush.msra.mxu0 0.0
        %632 = vmatpush.msra.mxu0 0.0
        %633 = vmatpush.msra.mxu0 %v447
        %634 = vmatmul.f32.gmra.mxu0 %v590
        %v635 = vpop.f32.mrf.mxu0
        %v636 = vadd.f32 0.0, %v635
        %637 = vmatmul.f32.gmra.mxu0 %v593
        %v638 = vpop.f32.mrf.mxu0
        %v639 = vadd.f32 0.0, %v638
        %640 = vdwg.mxu0
        %641 = vmatpush.msra.mxu0 0.0
        %642 = vmatpush.msra.mxu0 0.0
        %643 = vmatpush.msra.mxu0 0.0
        %644 = vmatpush.msra.mxu0 0.0
        %645 = vmatpush.msra.mxu0 0.0
        %646 = vmatpush.msra.mxu0 0.0
        %647 = vmatpush.msra.mxu0 0.0
        %648 = vmatpush.msra.mxu0 0.0
        %649 = vmatpush.msra.mxu0 0.0
        %650 = vmatpush.msra.mxu0 0.0
        %651 = vmatpush.msra.mxu0 0.0
        %652 = vmatpush.msra.mxu0 0.0
        %653 = vmatpush.msra.mxu0 0.0
        %654 = vmatpush.msra.mxu0 0.0
        %655 = vmatpush.msra.mxu0 0.0
        %656 = vmatpush.msra.mxu0 %v470
        %657 = vmatmul.f32.gmra.mxu0 %v590
        %v658 = vpop.f32.mrf.mxu0
        %v659 = vadd.f32 0.0, %v658
        %660 = vmatmul.f32.gmra.mxu0 %v593
        %v661 = vpop.f32.mrf.mxu0
        %v662 = vadd.f32 0.0, %v661
        %663 = vdwg.mxu0
        %664 = vmatpush.msra.mxu0 0.0
        %665 = vmatpush.msra.mxu0 0.0
        %666 = vmatpush.msra.mxu0 0.0
        %667 = vmatpush.msra.mxu0 0.0
        %668 = vmatpush.msra.mxu0 0.0
        %669 = vmatpush.msra.mxu0 0.0
        %670 = vmatpush.msra.mxu0 0.0
        %671 = vmatpush.msra.mxu0 0.0
        %672 = vmatpush.msra.mxu0 0.0
        %673 = vmatpush.msra.mxu0 0.0
        %674 = vmatpush.msra.mxu0 0.0
        %675 = vmatpush.msra.mxu0 0.0
        %676 = vmatpush.msra.mxu0 0.0
        %677 = vmatpush.msra.mxu0 0.0
        %678 = vmatpush.msra.mxu0 0.0
        %679 = vmatpush.msra.mxu0 %v493
        %680 = vmatmul.f32.gmra.mxu0 %v590
        %v681 = vpop.f32.mrf.mxu0
        %v682 = vadd.f32 0.0, %v681
        %683 = vmatmul.f32.gmra.mxu0 %v593
        %v684 = vpop.f32.mrf.mxu0
        %v685 = vadd.f32 0.0, %v684
        %686 = vdwg.mxu0
        %687 = vmatpush.msra.mxu0 0.0
        %688 = vmatpush.msra.mxu0 0.0
        %689 = vmatpush.msra.mxu0 0.0
        %690 = vmatpush.msra.mxu0 0.0
        %691 = vmatpush.msra.mxu0 0.0
        %692 = vmatpush.msra.mxu0 0.0
        %693 = vmatpush.msra.mxu0 0.0
        %694 = vmatpush.msra.mxu0 0.0
        %695 = vmatpush.msra.mxu0 0.0
        %696 = vmatpush.msra.mxu0 0.0
        %697 = vmatpush.msra.mxu0 0.0
        %698 = vmatpush.msra.mxu0 0.0
        %699 = vmatpush.msra.mxu0 0.0
        %700 = vmatpush.msra.mxu0 0.0
        %701 = vmatpush.msra.mxu0 0.0
        %702 = vmatpush.msra.mxu0 %v516
        %703 = vmatmul.f32.gmra.mxu0 %v590
        %v704 = vpop.f32.mrf.mxu0
        %v705 = vadd.f32 0.0, %v704
        %706 = vmatmul.f32.gmra.mxu0 %v593
        %v707 = vpop.f32.mrf.mxu0
        %v708 = vadd.f32 0.0, %v707
        %709 = vdwg.mxu0
        %710 = vmatpush.msra.mxu0 0.0
        %711 = vmatpush.msra.mxu0 0.0
        %712 = vmatpush.msra.mxu0 0.0
        %713 = vmatpush.msra.mxu0 0.0
        %714 = vmatpush.msra.mxu0 0.0
        %715 = vmatpush.msra.mxu0 0.0
        %716 = vmatpush.msra.mxu0 0.0
        %717 = vmatpush.msra.mxu0 0.0
        %718 = vmatpush.msra.mxu0 0.0
        %719 = vmatpush.msra.mxu0 0.0
        %720 = vmatpush.msra.mxu0 0.0
        %721 = vmatpush.msra.mxu0 0.0
        %722 = vmatpush.msra.mxu0 0.0
        %723 = vmatpush.msra.mxu0 0.0
        %724 = vmatpush.msra.mxu0 0.0
        %725 = vmatpush.msra.mxu0 %v539
        %726 = vmatmul.f32.gmra.mxu0 %v590
        %v727 = vpop.f32.mrf.mxu0
        %v728 = vadd.f32 0.0, %v727
        %729 = vmatmul.f32.gmra.mxu0 %v593
        %v730 = vpop.f32.mrf.mxu0
        %v731 = vadd.f32 0.0, %v730
        %732 = vdwg.mxu0
        %733 = vmatpush.msra.mxu0 0.0
        %734 = vmatpush.msra.mxu0 0.0
        %735 = vmatpush.msra.mxu0 0.0
        %736 = vmatpush.msra.mxu0 0.0
        %737 = vmatpush.msra.mxu0 0.0
        %738 = vmatpush.msra.mxu0 0.0
        %739 = vmatpush.msra.mxu0 0.0
        %740 = vmatpush.msra.mxu0 0.0
        %741 = vmatpush.msra.mxu0 0.0
        %742 = vmatpush.msra.mxu0 0.0
        %743 = vmatpush.msra.mxu0 0.0
        %744 = vmatpush.msra.mxu0 0.0
        %745 = vmatpush.msra.mxu0 0.0
        %746 = vmatpush.msra.mxu0 0.0
        %747 = vmatpush.msra.mxu0 0.0
        %748 = vmatpush.msra.mxu0 %v562
        %749 = vmatmul.f32.gmra.mxu0 %v590
        %v750 = vpop.f32.mrf.mxu0
        %v751 = vadd.f32 0.0, %v750
        %752 = vmatmul.f32.gmra.mxu0 %v593
        %v753 = vpop.f32.mrf.mxu0
        %v754 = vadd.f32 0.0, %v753
        %755 = vdwg.mxu0
        %756 = vmatpush.msra.mxu0 0.0
        %757 = vmatpush.msra.mxu0 0.0
        %758 = vmatpush.msra.mxu0 0.0
        %759 = vmatpush.msra.mxu0 0.0
        %760 = vmatpush.msra.mxu0 0.0
        %761 = vmatpush.msra.mxu0 0.0
        %762 = vmatpush.msra.mxu0 0.0
        %763 = vmatpush.msra.mxu0 0.0
        %764 = vmatpush.msra.mxu0 0.0
        %765 = vmatpush.msra.mxu0 0.0
        %766 = vmatpush.msra.mxu0 0.0
        %767 = vmatpush.msra.mxu0 0.0
        %768 = vmatpush.msra.mxu0 0.0
        %769 = vmatpush.msra.mxu0 0.0
        %770 = vmatpush.msra.mxu0 0.0
        %771 = vmatpush.msra.mxu0 %v585
        %772 = vmatmul.f32.gmra.mxu0 %v590
        %v773 = vpop.f32.mrf.mxu0
        %v774 = vadd.f32 0.0, %v773
        %775 = vmatmul.f32.gmra.mxu0 %v593
        %v776 = vpop.f32.mrf.mxu0
        %v777 = vadd.f32 0.0, %v776
        %778 = vdwg.mxu0
        %v787 = vrot.slane %v636, 7
        %vm788 = vcmask 1041409
        %v789 = vsel %vm788, %v787, %v613
        %v790 = vrot.slane %v659, 6
        %vm791 = vcmask 1042434
        %v792 = vsel %vm791, %v790, %v789
        %v793 = vrot.slane %v682, 5
        %vm794 = vcmask 1043459
        %v795 = vsel %vm794, %v793, %v792
        %v796 = vrot.slane %v705, 4
        %vm797 = vcmask 1044484
        %v798 = vsel %vm797, %v796, %v795
        %v799 = vrot.slane %v728, 3
        %vm800 = vcmask 1045509
        %v801 = vsel %vm800, %v799, %v798
        %v802 = vrot.slane %v751, 2
        %vm803 = vcmask 1046534
        %v804 = vsel %vm803, %v802, %v801
        %v805 = vrot.slane %v774, 1
        %vm806 = vcmask 1047559
        %v807 = vsel %vm806, %v805, %v804
        %v809 = vadd.f32 %v384, %v807
        %v811 = vrot.slane %v809, 1
        %v812 = vrot.slane %v809, 2
        %v813 = vrot.slane %v809, 3
        %v814 = vrot.slane %v809, 4
        %v815 = vrot.slane %v809, 5
        %v816 = vrot.slane %v809, 6
        %v817 = vrot.slane %v809, 7
        %vm825 = vcmask 122880
        %826 = vst.msk [vmem:[%s300] sm:$0x1] %vm825, %v809
        %827 = vst.msk [vmem:[%s300 + $0x10] sm:$0x1] %vm825, %v811
        %828 = vst.msk [vmem:[%s300 + $0x20] sm:$0x1] %vm825, %v812
        %829 = vst.msk [vmem:[%s300 + $0x30] sm:$0x1] %vm825, %v813
        %830 = vst.msk [vmem:[%s300 + $0x40] sm:$0x1] %vm825, %v814
        %831 = vst.msk [vmem:[%s300 + $0x50] sm:$0x1] %vm825, %v815
        %832 = vst.msk [vmem:[%s300 + $0x60] sm:$0x1] %vm825, %v816
        %833 = vst.msk [vmem:[%s300 + $0x70] sm:$0x1] %vm825, %v817
        %v834 = vrot.slane %v613, 1
        %v835 = vsel %vm788, %v636, %v834
        %v836 = vrot.slane %v659, 7
        %v837 = vsel %vm791, %v836, %v835
        %v838 = vrot.slane %v682, 6
        %v839 = vsel %vm794, %v838, %v837
        %v840 = vrot.slane %v705, 5
        %v841 = vsel %vm797, %v840, %v839
        %v842 = vrot.slane %v728, 4
        %v843 = vsel %vm800, %v842, %v841
        %v844 = vrot.slane %v751, 3
        %v845 = vsel %vm803, %v844, %v843
        %v846 = vrot.slane %v774, 2
        %v847 = vsel %vm806, %v846, %v845
        %848 = vrot.lane.b32.xlu0 %v847, 16
        %v849 = vpop.permute.xlu0 %848
        %v851 = vadd.f32 %v384, %v849
        %v853 = vrot.slane %v851, 1
        %v854 = vrot.slane %v851, 2
        %v855 = vrot.slane %v851, 3
        %v856 = vrot.slane %v851, 4
        %v857 = vrot.slane %v851, 5
        %v858 = vrot.slane %v851, 6
        %v859 = vrot.slane %v851, 7
        %v860 = vperm.slane %v851, 0
        %v861 = vperm.slane %v853, 0
        %v862 = vperm.slane %v854, 0
        %v863 = vperm.slane %v855, 0
        %v864 = vperm.slane %v856, 0
        %v865 = vperm.slane %v857, 0
        %v866 = vperm.slane %v858, 0
        %v867 = vperm.slane %v859, 0
        %868 = vrot.lane.b32.xlu0 %v860, 112
        %v869 = vpop.permute.xlu0 %868
        %870 = vrot.lane.b32.xlu0 %v861, 112
        %v871 = vpop.permute.xlu0 %870
        %872 = vrot.lane.b32.xlu0 %v862, 112
        %v873 = vpop.permute.xlu0 %872
        %874 = vrot.lane.b32.xlu0 %v863, 112
        %v875 = vpop.permute.xlu0 %874
        %876 = vrot.lane.b32.xlu0 %v864, 112
        %v877 = vpop.permute.xlu0 %876
        %878 = vrot.lane.b32.xlu0 %v865, 112
        %v879 = vpop.permute.xlu0 %878
        %880 = vrot.lane.b32.xlu0 %v866, 112
        %v881 = vpop.permute.xlu0 %880
        %882 = vrot.lane.b32.xlu0 %v867, 112
        %v883 = vpop.permute.xlu0 %882
        %892 = vst.msk [vmem:[%s300 + $0x1] sm:$0x1] %vm825, %v869
        %893 = vst.msk [vmem:[%s300 + $0x11] sm:$0x1] %vm825, %v871
        %894 = vst.msk [vmem:[%s300 + $0x21] sm:$0x1] %vm825, %v873
        %895 = vst.msk [vmem:[%s300 + $0x31] sm:$0x1] %vm825, %v875
        %896 = vst.msk [vmem:[%s300 + $0x41] sm:$0x1] %vm825, %v877
        %897 = vst.msk [vmem:[%s300 + $0x51] sm:$0x1] %vm825, %v879
        %898 = vst.msk [vmem:[%s300 + $0x61] sm:$0x1] %vm825, %v881
        %899 = vst.msk [vmem:[%s300 + $0x71] sm:$0x1] %vm825, %v883
        %v900 = vrot.slane %v613, 2
        %v901 = vrot.slane %v636, 1
        %v902 = vsel %vm788, %v901, %v900
        %v903 = vsel %vm791, %v659, %v902
        %v904 = vrot.slane %v682, 7
        %v905 = vsel %vm794, %v904, %v903
        %v906 = vrot.slane %v705, 6
        %v907 = vsel %vm797, %v906, %v905
        %v908 = vrot.slane %v728, 5
        %v909 = vsel %vm800, %v908, %v907
        %v910 = vrot.slane %v751, 4
        %v911 = vsel %vm803, %v910, %v909
        %v912 = vrot.slane %v774, 3
        %v913 = vsel %vm806, %v912, %v911
        %914 = vrot.lane.b32.xlu0 %v913, 32
        %v915 = vpop.permute.xlu0 %914
        %v917 = vadd.f32 %v384, %v915
        %v919 = vrot.slane %v917, 1
        %v920 = vrot.slane %v917, 2
        %v921 = vrot.slane %v917, 3
        %v922 = vrot.slane %v917, 4
        %v923 = vrot.slane %v917, 5
        %v924 = vrot.slane %v917, 6
        %v925 = vrot.slane %v917, 7
        %v926 = vperm.slane %v917, 0
        %v927 = vperm.slane %v919, 0
        %v928 = vperm.slane %v920, 0
        %v929 = vperm.slane %v921, 0
        %v930 = vperm.slane %v922, 0
        %v931 = vperm.slane %v923, 0
        %v932 = vperm.slane %v924, 0
        %v933 = vperm.slane %v925, 0
        %934 = vrot.lane.b32.xlu0 %v926, 96
        %v935 = vpop.permute.xlu0 %934
        %936 = vrot.lane.b32.xlu0 %v927, 96
        %v937 = vpop.permute.xlu0 %936
        %938 = vrot.lane.b32.xlu0 %v928, 96
        %v939 = vpop.permute.xlu0 %938
        %940 = vrot.lane.b32.xlu0 %v929, 96
        %v941 = vpop.permute.xlu0 %940
        %942 = vrot.lane.b32.xlu0 %v930, 96
        %v943 = vpop.permute.xlu0 %942
        %944 = vrot.lane.b32.xlu0 %v931, 96
        %v945 = vpop.permute.xlu0 %944
        %946 = vrot.lane.b32.xlu0 %v932, 96
        %v947 = vpop.permute.xlu0 %946
        %948 = vrot.lane.b32.xlu0 %v933, 96
        %v949 = vpop.permute.xlu0 %948
        %958 = vst.msk [vmem:[%s300 + $0x2] sm:$0x1] %vm825, %v935
        %959 = vst.msk [vmem:[%s300 + $0x12] sm:$0x1] %vm825, %v937
        %960 = vst.msk [vmem:[%s300 + $0x22] sm:$0x1] %vm825, %v939
        %961 = vst.msk [vmem:[%s300 + $0x32] sm:$0x1] %vm825, %v941
        %962 = vst.msk [vmem:[%s300 + $0x42] sm:$0x1] %vm825, %v943
        %963 = vst.msk [vmem:[%s300 + $0x52] sm:$0x1] %vm825, %v945
        %964 = vst.msk [vmem:[%s300 + $0x62] sm:$0x1] %vm825, %v947
        %965 = vst.msk [vmem:[%s300 + $0x72] sm:$0x1] %vm825, %v949
        %v966 = vrot.slane %v613, 3
        %v967 = vrot.slane %v636, 2
        %v968 = vsel %vm788, %v967, %v966
        %v969 = vrot.slane %v659, 1
        %v970 = vsel %vm791, %v969, %v968
        %v971 = vsel %vm794, %v682, %v970
        %v972 = vrot.slane %v705, 7
        %v973 = vsel %vm797, %v972, %v971
        %v974 = vrot.slane %v728, 6
        %v975 = vsel %vm800, %v974, %v973
        %v976 = vrot.slane %v751, 5
        %v977 = vsel %vm803, %v976, %v975
        %v978 = vrot.slane %v774, 4
        %v979 = vsel %vm806, %v978, %v977
        %980 = vrot.lane.b32.xlu0 %v979, 48
        %v981 = vpop.permute.xlu0 %980
        %v983 = vadd.f32 %v384, %v981
        %v985 = vrot.slane %v983, 1
        %v986 = vrot.slane %v983, 2
        %v987 = vrot.slane %v983, 3
        %v988 = vrot.slane %v983, 4
        %v989 = vrot.slane %v983, 5
        %v990 = vrot.slane %v983, 6
        %v991 = vrot.slane %v983, 7
        %v992 = vperm.slane %v983, 0
        %v993 = vperm.slane %v985, 0
        %v994 = vperm.slane %v986, 0
        %v995 = vperm.slane %v987, 0
        %v996 = vperm.slane %v988, 0
        %v997 = vperm.slane %v989, 0
        %v998 = vperm.slane %v990, 0
        %v999 = vperm.slane %v991, 0
        %1000 = vrot.lane.b32.xlu0 %v992, 80
        %v1001 = vpop.permute.xlu0 %1000
        %1002 = vrot.lane.b32.xlu0 %v993, 80
        %v1003 = vpop.permute.xlu0 %1002
        %1004 = vrot.lane.b32.xlu0 %v994, 80
        %v1005 = vpop.permute.xlu0 %1004
        %1006 = vrot.lane.b32.xlu0 %v995, 80
        %v1007 = vpop.permute.xlu0 %1006
        %1008 = vrot.lane.b32.xlu0 %v996, 80
        %v1009 = vpop.permute.xlu0 %1008
        %1010 = vrot.lane.b32.xlu0 %v997, 80
        %v1011 = vpop.permute.xlu0 %1010
        %1012 = vrot.lane.b32.xlu0 %v998, 80
        %v1013 = vpop.permute.xlu0 %1012
        %1014 = vrot.lane.b32.xlu0 %v999, 80
        %v1015 = vpop.permute.xlu0 %1014
        %1024 = vst.msk [vmem:[%s300 + $0x3] sm:$0x1] %vm825, %v1001
        %1025 = vst.msk [vmem:[%s300 + $0x13] sm:$0x1] %vm825, %v1003
        %1026 = vst.msk [vmem:[%s300 + $0x23] sm:$0x1] %vm825, %v1005
        %1027 = vst.msk [vmem:[%s300 + $0x33] sm:$0x1] %vm825, %v1007
        %1028 = vst.msk [vmem:[%s300 + $0x43] sm:$0x1] %vm825, %v1009
        %1029 = vst.msk [vmem:[%s300 + $0x53] sm:$0x1] %vm825, %v1011
        %1030 = vst.msk [vmem:[%s300 + $0x63] sm:$0x1] %vm825, %v1013
        %1031 = vst.msk [vmem:[%s300 + $0x73] sm:$0x1] %vm825, %v1015
        %v1032 = vrot.slane %v613, 4
        %v1033 = vrot.slane %v636, 3
        %v1034 = vsel %vm788, %v1033, %v1032
        %v1035 = vrot.slane %v659, 2
        %v1036 = vsel %vm791, %v1035, %v1034
        %v1037 = vrot.slane %v682, 1
        %v1038 = vsel %vm794, %v1037, %v1036
        %v1039 = vsel %vm797, %v705, %v1038
        %v1040 = vrot.slane %v728, 7
        %v1041 = vsel %vm800, %v1040, %v1039
        %v1042 = vrot.slane %v751, 6
        %v1043 = vsel %vm803, %v1042, %v1041
        %v1044 = vrot.slane %v774, 5
        %v1045 = vsel %vm806, %v1044, %v1043
        %1046 = vrot.lane.b32.xlu0 %v1045, 64
        %v1047 = vpop.permute.xlu0 %1046
        %v1049 = vadd.f32 %v384, %v1047
        %v1051 = vrot.slane %v1049, 1
        %v1052 = vrot.slane %v1049, 2
        %v1053 = vrot.slane %v1049, 3
        %v1054 = vrot.slane %v1049, 4
        %v1055 = vrot.slane %v1049, 5
        %v1056 = vrot.slane %v1049, 6
        %v1057 = vrot.slane %v1049, 7
        %v1058 = vperm.slane %v1049, 0
        %v1059 = vperm.slane %v1051, 0
        %v1060 = vperm.slane %v1052, 0
        %v1061 = vperm.slane %v1053, 0
        %v1062 = vperm.slane %v1054, 0
        %v1063 = vperm.slane %v1055, 0
        %v1064 = vperm.slane %v1056, 0
        %v1065 = vperm.slane %v1057, 0
        %1066 = vrot.lane.b32.xlu0 %v1058, 64
        %v1067 = vpop.permute.xlu0 %1066
        %1068 = vrot.lane.b32.xlu0 %v1059, 64
        %v1069 = vpop.permute.xlu0 %1068
        %1070 = vrot.lane.b32.xlu0 %v1060, 64
        %v1071 = vpop.permute.xlu0 %1070
        %1072 = vrot.lane.b32.xlu0 %v1061, 64
        %v1073 = vpop.permute.xlu0 %1072
        %1074 = vrot.lane.b32.xlu0 %v1062, 64
        %v1075 = vpop.permute.xlu0 %1074
        %1076 = vrot.lane.b32.xlu0 %v1063, 64
        %v1077 = vpop.permute.xlu0 %1076
        %1078 = vrot.lane.b32.xlu0 %v1064, 64
        %v1079 = vpop.permute.xlu0 %1078
        %1080 = vrot.lane.b32.xlu0 %v1065, 64
        %v1081 = vpop.permute.xlu0 %1080
        %1090 = vst.msk [vmem:[%s300 + $0x4] sm:$0x1] %vm825, %v1067
        %1091 = vst.msk [vmem:[%s300 + $0x14] sm:$0x1] %vm825, %v1069
        %1092 = vst.msk [vmem:[%s300 + $0x24] sm:$0x1] %vm825, %v1071
        %1093 = vst.msk [vmem:[%s300 + $0x34] sm:$0x1] %vm825, %v1073
        %1094 = vst.msk [vmem:[%s300 + $0x44] sm:$0x1] %vm825, %v1075
        %1095 = vst.msk [vmem:[%s300 + $0x54] sm:$0x1] %vm825, %v1077
        %1096 = vst.msk [vmem:[%s300 + $0x64] sm:$0x1] %vm825, %v1079
        %1097 = vst.msk [vmem:[%s300 + $0x74] sm:$0x1] %vm825, %v1081
        %v1098 = vrot.slane %v613, 5
        %v1099 = vrot.slane %v636, 4
        %v1100 = vsel %vm788, %v1099, %v1098
        %v1101 = vrot.slane %v659, 3
        %v1102 = vsel %vm791, %v1101, %v1100
        %v1103 = vrot.slane %v682, 2
        %v1104 = vsel %vm794, %v1103, %v1102
        %v1105 = vrot.slane %v705, 1
        %v1106 = vsel %vm797, %v1105, %v1104
        %v1107 = vsel %vm800, %v728, %v1106
        %v1108 = vrot.slane %v751, 7
        %v1109 = vsel %vm803, %v1108, %v1107
        %v1110 = vrot.slane %v774, 6
        %v1111 = vsel %vm806, %v1110, %v1109
        %1112 = vrot.lane.b32.xlu0 %v1111, 80
        %v1113 = vpop.permute.xlu0 %1112
        %v1115 = vadd.f32 %v384, %v1113
        %v1117 = vrot.slane %v1115, 1
        %v1118 = vrot.slane %v1115, 2
        %v1119 = vrot.slane %v1115, 3
        %v1120 = vrot.slane %v1115, 4
        %v1121 = vrot.slane %v1115, 5
        %v1122 = vrot.slane %v1115, 6
        %v1123 = vrot.slane %v1115, 7
        %v1124 = vperm.slane %v1115, 0
        %v1125 = vperm.slane %v1117, 0
        %v1126 = vperm.slane %v1118, 0
        %v1127 = vperm.slane %v1119, 0
        %v1128 = vperm.slane %v1120, 0
        %v1129 = vperm.slane %v1121, 0
        %v1130 = vperm.slane %v1122, 0
        %v1131 = vperm.slane %v1123, 0
        %1132 = vrot.lane.b32.xlu0 %v1124, 48
        %v1133 = vpop.permute.xlu0 %1132
        %1134 = vrot.lane.b32.xlu0 %v1125, 48
        %v1135 = vpop.permute.xlu0 %1134
        %1136 = vrot.lane.b32.xlu0 %v1126, 48
        %v1137 = vpop.permute.xlu0 %1136
        %1138 = vrot.lane.b32.xlu0 %v1127, 48
        %v1139 = vpop.permute.xlu0 %1138
        %1140 = vrot.lane.b32.xlu0 %v1128, 48
        %v1141 = vpop.permute.xlu0 %1140
        %1142 = vrot.lane.b32.xlu0 %v1129, 48
        %v1143 = vpop.permute.xlu0 %1142
        %1144 = vrot.lane.b32.xlu0 %v1130, 48
        %v1145 = vpop.permute.xlu0 %1144
        %1146 = vrot.lane.b32.xlu0 %v1131, 48
        %v1147 = vpop.permute.xlu0 %1146
        %1156 = vst.msk [vmem:[%s300 + $0x5] sm:$0x1] %vm825, %v1133
        %1157 = vst.msk [vmem:[%s300 + $0x15] sm:$0x1] %vm825, %v1135
        %1158 = vst.msk [vmem:[%s300 + $0x25] sm:$0x1] %vm825, %v1137
        %1159 = vst.msk [vmem:[%s300 + $0x35] sm:$0x1] %vm825, %v1139
        %1160 = vst.msk [vmem:[%s300 + $0x45] sm:$0x1] %vm825, %v1141
        %1161 = vst.msk [vmem:[%s300 + $0x55] sm:$0x1] %vm825, %v1143
        %1162 = vst.msk [vmem:[%s300 + $0x65] sm:$0x1] %vm825, %v1145
        %1163 = vst.msk [vmem:[%s300 + $0x75] sm:$0x1] %vm825, %v1147
        %v1164 = vrot.slane %v613, 6
        %v1165 = vrot.slane %v636, 5
        %v1166 = vsel %vm788, %v1165, %v1164
        %v1167 = vrot.slane %v659, 4
        %v1168 = vsel %vm791, %v1167, %v1166
        %v1169 = vrot.slane %v682, 3
        %v1170 = vsel %vm794, %v1169, %v1168
        %v1171 = vrot.slane %v705, 2
        %v1172 = vsel %vm797, %v1171, %v1170
        %v1173 = vrot.slane %v728, 1
        %v1174 = vsel %vm800, %v1173, %v1172
        %v1175 = vsel %vm803, %v751, %v1174
        %v1176 = vrot.slane %v774, 7
        %v1177 = vsel %vm806, %v1176, %v1175
        %1178 = vrot.lane.b32.xlu0 %v1177, 96
        %v1179 = vpop.permute.xlu0 %1178
        %v1181 = vadd.f32 %v384, %v1179
        %v1183 = vrot.slane %v1181, 1
        %v1184 = vrot.slane %v1181, 2
        %v1185 = vrot.slane %v1181, 3
        %v1186 = vrot.slane %v1181, 4
        %v1187 = vrot.slane %v1181, 5
        %v1188 = vrot.slane %v1181, 6
        %v1189 = vrot.slane %v1181, 7
        %v1190 = vperm.slane %v1181, 0
        %v1191 = vperm.slane %v1183, 0
        %v1192 = vperm.slane %v1184, 0
        %v1193 = vperm.slane %v1185, 0
        %v1194 = vperm.slane %v1186, 0
        %v1195 = vperm.slane %v1187, 0
        %v1196 = vperm.slane %v1188, 0
        %v1197 = vperm.slane %v1189, 0
        %1198 = vrot.lane.b32.xlu0 %v1190, 32
        %v1199 = vpop.permute.xlu0 %1198
        %1200 = vrot.lane.b32.xlu0 %v1191, 32
        %v1201 = vpop.permute.xlu0 %1200
        %1202 = vrot.lane.b32.xlu0 %v1192, 32
        %v1203 = vpop.permute.xlu0 %1202
        %1204 = vrot.lane.b32.xlu0 %v1193, 32
        %v1205 = vpop.permute.xlu0 %1204
        %1206 = vrot.lane.b32.xlu0 %v1194, 32
        %v1207 = vpop.permute.xlu0 %1206
        %1208 = vrot.lane.b32.xlu0 %v1195, 32
        %v1209 = vpop.permute.xlu0 %1208
        %1210 = vrot.lane.b32.xlu0 %v1196, 32
        %v1211 = vpop.permute.xlu0 %1210
        %1212 = vrot.lane.b32.xlu0 %v1197, 32
        %v1213 = vpop.permute.xlu0 %1212
        %1222 = vst.msk [vmem:[%s300 + $0x6] sm:$0x1] %vm825, %v1199
        %1223 = vst.msk [vmem:[%s300 + $0x16] sm:$0x1] %vm825, %v1201
        %1224 = vst.msk [vmem:[%s300 + $0x26] sm:$0x1] %vm825, %v1203
        %1225 = vst.msk [vmem:[%s300 + $0x36] sm:$0x1] %vm825, %v1205
        %1226 = vst.msk [vmem:[%s300 + $0x46] sm:$0x1] %vm825, %v1207
        %1227 = vst.msk [vmem:[%s300 + $0x56] sm:$0x1] %vm825, %v1209
        %1228 = vst.msk [vmem:[%s300 + $0x66] sm:$0x1] %vm825, %v1211
        %1229 = vst.msk [vmem:[%s300 + $0x76] sm:$0x1] %vm825, %v1213
        %v1230 = vrot.slane %v613, 7
        %v1231 = vrot.slane %v636, 6
        %v1232 = vsel %vm788, %v1231, %v1230
        %v1233 = vrot.slane %v659, 5
        %v1234 = vsel %vm791, %v1233, %v1232
        %v1235 = vrot.slane %v682, 4
        %v1236 = vsel %vm794, %v1235, %v1234
        %v1237 = vrot.slane %v705, 3
        %v1238 = vsel %vm797, %v1237, %v1236
        %v1239 = vrot.slane %v728, 2
        %v1240 = vsel %vm800, %v1239, %v1238
        %v1241 = vrot.slane %v751, 1
        %v1242 = vsel %vm803, %v1241, %v1240
        %v1243 = vsel %vm806, %v774, %v1242
        %1244 = vrot.lane.b32.xlu0 %v1243, 112
        %v1245 = vpop.permute.xlu0 %1244
        %v1247 = vadd.f32 %v384, %v1245
        %v1249 = vrot.slane %v1247, 1
        %v1250 = vrot.slane %v1247, 2
        %v1251 = vrot.slane %v1247, 3
        %v1252 = vrot.slane %v1247, 4
        %v1253 = vrot.slane %v1247, 5
        %v1254 = vrot.slane %v1247, 6
        %v1255 = vrot.slane %v1247, 7
        %v1256 = vperm.slane %v1247, 0
        %v1257 = vperm.slane %v1249, 0
        %v1258 = vperm.slane %v1250, 0
        %v1259 = vperm.slane %v1251, 0
        %v1260 = vperm.slane %v1252, 0
        %v1261 = vperm.slane %v1253, 0
        %v1262 = vperm.slane %v1254, 0
        %v1263 = vperm.slane %v1255, 0
        %1264 = vrot.lane.b32.xlu0 %v1256, 16
        %v1265 = vpop.permute.xlu0 %1264
        %1266 = vrot.lane.b32.xlu0 %v1257, 16
        %v1267 = vpop.permute.xlu0 %1266
        %1268 = vrot.lane.b32.xlu0 %v1258, 16
        %v1269 = vpop.permute.xlu0 %1268
        %1270 = vrot.lane.b32.xlu0 %v1259, 16
        %v1271 = vpop.permute.xlu0 %1270
        %1272 = vrot.lane.b32.xlu0 %v1260, 16
        %v1273 = vpop.permute.xlu0 %1272
        %1274 = vrot.lane.b32.xlu0 %v1261, 16
        %v1275 = vpop.permute.xlu0 %1274
        %1276 = vrot.lane.b32.xlu0 %v1262, 16
        %v1277 = vpop.permute.xlu0 %1276
        %1278 = vrot.lane.b32.xlu0 %v1263, 16
        %v1279 = vpop.permute.xlu0 %1278
        %1288 = vst.msk [vmem:[%s300 + $0x7] sm:$0x1] %vm825, %v1265
        %1289 = vst.msk [vmem:[%s300 + $0x17] sm:$0x1] %vm825, %v1267
        %1290 = vst.msk [vmem:[%s300 + $0x27] sm:$0x1] %vm825, %v1269
        %1291 = vst.msk [vmem:[%s300 + $0x37] sm:$0x1] %vm825, %v1271
        %1292 = vst.msk [vmem:[%s300 + $0x47] sm:$0x1] %vm825, %v1273
        %1293 = vst.msk [vmem:[%s300 + $0x57] sm:$0x1] %vm825, %v1275
        %1294 = vst.msk [vmem:[%s300 + $0x67] sm:$0x1] %vm825, %v1277
        %1295 = vst.msk [vmem:[%s300 + $0x77] sm:$0x1] %vm825, %v1279
        %v1304 = vrot.slane %v639, 7
        %v1305 = vsel %vm788, %v1304, %v616
        %v1306 = vrot.slane %v662, 6
        %v1307 = vsel %vm791, %v1306, %v1305
        %v1308 = vrot.slane %v685, 5
        %v1309 = vsel %vm794, %v1308, %v1307
        %v1310 = vrot.slane %v708, 4
        %v1311 = vsel %vm797, %v1310, %v1309
        %v1312 = vrot.slane %v731, 3
        %v1313 = vsel %vm800, %v1312, %v1311
        %v1314 = vrot.slane %v754, 2
        %v1315 = vsel %vm803, %v1314, %v1313
        %v1316 = vrot.slane %v777, 1
        %v1317 = vsel %vm806, %v1316, %v1315
        %v1319 = vadd.f32 %v385, %v1317
        %v1321 = vrot.slane %v1319, 1
        %v1322 = vrot.slane %v1319, 2
        %v1323 = vrot.slane %v1319, 3
        %v1324 = vrot.slane %v1319, 4
        %v1325 = vrot.slane %v1319, 5
        %v1326 = vrot.slane %v1319, 6
        %v1327 = vrot.slane %v1319, 7
        %1335 = vst.msk [vmem:[%s300 + $0x8] sm:$0x1] %vm825, %v1319
        %1336 = vst.msk [vmem:[%s300 + $0x18] sm:$0x1] %vm825, %v1321
        %1337 = vst.msk [vmem:[%s300 + $0x28] sm:$0x1] %vm825, %v1322
        %1338 = vst.msk [vmem:[%s300 + $0x38] sm:$0x1] %vm825, %v1323
        %1339 = vst.msk [vmem:[%s300 + $0x48] sm:$0x1] %vm825, %v1324
        %1340 = vst.msk [vmem:[%s300 + $0x58] sm:$0x1] %vm825, %v1325
        %1341 = vst.msk [vmem:[%s300 + $0x68] sm:$0x1] %vm825, %v1326
        %1342 = vst.msk [vmem:[%s300 + $0x78] sm:$0x1] %vm825, %v1327
        %v1343 = vrot.slane %v616, 1
        %v1344 = vsel %vm788, %v639, %v1343
        %v1345 = vrot.slane %v662, 7
        %v1346 = vsel %vm791, %v1345, %v1344
        %v1347 = vrot.slane %v685, 6
        %v1348 = vsel %vm794, %v1347, %v1346
        %v1349 = vrot.slane %v708, 5
        %v1350 = vsel %vm797, %v1349, %v1348
        %v1351 = vrot.slane %v731, 4
        %v1352 = vsel %vm800, %v1351, %v1350
        %v1353 = vrot.slane %v754, 3
        %v1354 = vsel %vm803, %v1353, %v1352
        %v1355 = vrot.slane %v777, 2
        %v1356 = vsel %vm806, %v1355, %v1354
        %1357 = vrot.lane.b32.xlu0 %v1356, 16
        %v1358 = vpop.permute.xlu0 %1357
        %v1360 = vadd.f32 %v385, %v1358
        %v1362 = vrot.slane %v1360, 1
        %v1363 = vrot.slane %v1360, 2
        %v1364 = vrot.slane %v1360, 3
        %v1365 = vrot.slane %v1360, 4
        %v1366 = vrot.slane %v1360, 5
        %v1367 = vrot.slane %v1360, 6
        %v1368 = vrot.slane %v1360, 7
        %v1369 = vperm.slane %v1360, 0
        %v1370 = vperm.slane %v1362, 0
        %v1371 = vperm.slane %v1363, 0
        %v1372 = vperm.slane %v1364, 0
        %v1373 = vperm.slane %v1365, 0
        %v1374 = vperm.slane %v1366, 0
        %v1375 = vperm.slane %v1367, 0
        %v1376 = vperm.slane %v1368, 0
        %1377 = vrot.lane.b32.xlu0 %v1369, 112
        %v1378 = vpop.permute.xlu0 %1377
        %1379 = vrot.lane.b32.xlu0 %v1370, 112
        %v1380 = vpop.permute.xlu0 %1379
        %1381 = vrot.lane.b32.xlu0 %v1371, 112
        %v1382 = vpop.permute.xlu0 %1381
        %1383 = vrot.lane.b32.xlu0 %v1372, 112
        %v1384 = vpop.permute.xlu0 %1383
        %1385 = vrot.lane.b32.xlu0 %v1373, 112
        %v1386 = vpop.permute.xlu0 %1385
        %1387 = vrot.lane.b32.xlu0 %v1374, 112
        %v1388 = vpop.permute.xlu0 %1387
        %1389 = vrot.lane.b32.xlu0 %v1375, 112
        %v1390 = vpop.permute.xlu0 %1389
        %1391 = vrot.lane.b32.xlu0 %v1376, 112
        %v1392 = vpop.permute.xlu0 %1391
        %1401 = vst.msk [vmem:[%s300 + $0x9] sm:$0x1] %vm825, %v1378
        %1402 = vst.msk [vmem:[%s300 + $0x19] sm:$0x1] %vm825, %v1380
        %1403 = vst.msk [vmem:[%s300 + $0x29] sm:$0x1] %vm825, %v1382
        %1404 = vst.msk [vmem:[%s300 + $0x39] sm:$0x1] %vm825, %v1384
        %1405 = vst.msk [vmem:[%s300 + $0x49] sm:$0x1] %vm825, %v1386
        %1406 = vst.msk [vmem:[%s300 + $0x59] sm:$0x1] %vm825, %v1388
        %1407 = vst.msk [vmem:[%s300 + $0x69] sm:$0x1] %vm825, %v1390
        %1408 = vst.msk [vmem:[%s300 + $0x79] sm:$0x1] %vm825, %v1392
        %v1409 = vrot.slane %v616, 2
        %v1410 = vrot.slane %v639, 1
        %v1411 = vsel %vm788, %v1410, %v1409
        %v1412 = vsel %vm791, %v662, %v1411
        %v1413 = vrot.slane %v685, 7
        %v1414 = vsel %vm794, %v1413, %v1412
        %v1415 = vrot.slane %v708, 6
        %v1416 = vsel %vm797, %v1415, %v1414
        %v1417 = vrot.slane %v731, 5
        %v1418 = vsel %vm800, %v1417, %v1416
        %v1419 = vrot.slane %v754, 4
        %v1420 = vsel %vm803, %v1419, %v1418
        %v1421 = vrot.slane %v777, 3
        %v1422 = vsel %vm806, %v1421, %v1420
        %1423 = vrot.lane.b32.xlu0 %v1422, 32
        %v1424 = vpop.permute.xlu0 %1423
        %v1426 = vadd.f32 %v385, %v1424
        %v1428 = vrot.slane %v1426, 1
        %v1429 = vrot.slane %v1426, 2
        %v1430 = vrot.slane %v1426, 3
        %v1431 = vrot.slane %v1426, 4
        %v1432 = vrot.slane %v1426, 5
        %v1433 = vrot.slane %v1426, 6
        %v1434 = vrot.slane %v1426, 7
        %v1435 = vperm.slane %v1426, 0
        %v1436 = vperm.slane %v1428, 0
        %v1437 = vperm.slane %v1429, 0
        %v1438 = vperm.slane %v1430, 0
        %v1439 = vperm.slane %v1431, 0
        %v1440 = vperm.slane %v1432, 0
        %v1441 = vperm.slane %v1433, 0
        %v1442 = vperm.slane %v1434, 0
        %1443 = vrot.lane.b32.xlu0 %v1435, 96
        %v1444 = vpop.permute.xlu0 %1443
        %1445 = vrot.lane.b32.xlu0 %v1436, 96
        %v1446 = vpop.permute.xlu0 %1445
        %1447 = vrot.lane.b32.xlu0 %v1437, 96
        %v1448 = vpop.permute.xlu0 %1447
        %1449 = vrot.lane.b32.xlu0 %v1438, 96
        %v1450 = vpop.permute.xlu0 %1449
        %1451 = vrot.lane.b32.xlu0 %v1439, 96
        %v1452 = vpop.permute.xlu0 %1451
        %1453 = vrot.lane.b32.xlu0 %v1440, 96
        %v1454 = vpop.permute.xlu0 %1453
        %1455 = vrot.lane.b32.xlu0 %v1441, 96
        %v1456 = vpop.permute.xlu0 %1455
        %1457 = vrot.lane.b32.xlu0 %v1442, 96
        %v1458 = vpop.permute.xlu0 %1457
        %1467 = vst.msk [vmem:[%s300 + $0xa] sm:$0x1] %vm825, %v1444
        %1468 = vst.msk [vmem:[%s300 + $0x1a] sm:$0x1] %vm825, %v1446
        %1469 = vst.msk [vmem:[%s300 + $0x2a] sm:$0x1] %vm825, %v1448
        %1470 = vst.msk [vmem:[%s300 + $0x3a] sm:$0x1] %vm825, %v1450
        %1471 = vst.msk [vmem:[%s300 + $0x4a] sm:$0x1] %vm825, %v1452
        %1472 = vst.msk [vmem:[%s300 + $0x5a] sm:$0x1] %vm825, %v1454
        %1473 = vst.msk [vmem:[%s300 + $0x6a] sm:$0x1] %vm825, %v1456
        %1474 = vst.msk [vmem:[%s300 + $0x7a] sm:$0x1] %vm825, %v1458
        %v1475 = vrot.slane %v616, 3
        %v1476 = vrot.slane %v639, 2
        %v1477 = vsel %vm788, %v1476, %v1475
        %v1478 = vrot.slane %v662, 1
        %v1479 = vsel %vm791, %v1478, %v1477
        %v1480 = vsel %vm794, %v685, %v1479
        %v1481 = vrot.slane %v708, 7
        %v1482 = vsel %vm797, %v1481, %v1480
        %v1483 = vrot.slane %v731, 6
        %v1484 = vsel %vm800, %v1483, %v1482
        %v1485 = vrot.slane %v754, 5
        %v1486 = vsel %vm803, %v1485, %v1484
        %v1487 = vrot.slane %v777, 4
        %v1488 = vsel %vm806, %v1487, %v1486
        %1489 = vrot.lane.b32.xlu0 %v1488, 48
        %v1490 = vpop.permute.xlu0 %1489
        %v1492 = vadd.f32 %v385, %v1490
        %v1494 = vrot.slane %v1492, 1
        %v1495 = vrot.slane %v1492, 2
        %v1496 = vrot.slane %v1492, 3
        %v1497 = vrot.slane %v1492, 4
        %v1498 = vrot.slane %v1492, 5
        %v1499 = vrot.slane %v1492, 6
        %v1500 = vrot.slane %v1492, 7
        %v1501 = vperm.slane %v1492, 0
        %v1502 = vperm.slane %v1494, 0
        %v1503 = vperm.slane %v1495, 0
        %v1504 = vperm.slane %v1496, 0
        %v1505 = vperm.slane %v1497, 0
        %v1506 = vperm.slane %v1498, 0
        %v1507 = vperm.slane %v1499, 0
        %v1508 = vperm.slane %v1500, 0
        %1509 = vrot.lane.b32.xlu0 %v1501, 80
        %v1510 = vpop.permute.xlu0 %1509
        %1511 = vrot.lane.b32.xlu0 %v1502, 80
        %v1512 = vpop.permute.xlu0 %1511
        %1513 = vrot.lane.b32.xlu0 %v1503, 80
        %v1514 = vpop.permute.xlu0 %1513
        %1515 = vrot.lane.b32.xlu0 %v1504, 80
        %v1516 = vpop.permute.xlu0 %1515
        %1517 = vrot.lane.b32.xlu0 %v1505, 80
        %v1518 = vpop.permute.xlu0 %1517
        %1519 = vrot.lane.b32.xlu0 %v1506, 80
        %v1520 = vpop.permute.xlu0 %1519
        %1521 = vrot.lane.b32.xlu0 %v1507, 80
        %v1522 = vpop.permute.xlu0 %1521
        %1523 = vrot.lane.b32.xlu0 %v1508, 80
        %v1524 = vpop.permute.xlu0 %1523
        %1533 = vst.msk [vmem:[%s300 + $0xb] sm:$0x1] %vm825, %v1510
        %1534 = vst.msk [vmem:[%s300 + $0x1b] sm:$0x1] %vm825, %v1512
        %1535 = vst.msk [vmem:[%s300 + $0x2b] sm:$0x1] %vm825, %v1514
        %1536 = vst.msk [vmem:[%s300 + $0x3b] sm:$0x1] %vm825, %v1516
        %1537 = vst.msk [vmem:[%s300 + $0x4b] sm:$0x1] %vm825, %v1518
        %1538 = vst.msk [vmem:[%s300 + $0x5b] sm:$0x1] %vm825, %v1520
        %1539 = vst.msk [vmem:[%s300 + $0x6b] sm:$0x1] %vm825, %v1522
        %1540 = vst.msk [vmem:[%s300 + $0x7b] sm:$0x1] %vm825, %v1524
        %v1541 = vrot.slane %v616, 4
        %v1542 = vrot.slane %v639, 3
        %v1543 = vsel %vm788, %v1542, %v1541
        %v1544 = vrot.slane %v662, 2
        %v1545 = vsel %vm791, %v1544, %v1543
        %v1546 = vrot.slane %v685, 1
        %v1547 = vsel %vm794, %v1546, %v1545
        %v1548 = vsel %vm797, %v708, %v1547
        %v1549 = vrot.slane %v731, 7
        %v1550 = vsel %vm800, %v1549, %v1548
        %v1551 = vrot.slane %v754, 6
        %v1552 = vsel %vm803, %v1551, %v1550
        %v1553 = vrot.slane %v777, 5
        %v1554 = vsel %vm806, %v1553, %v1552
        %1555 = vrot.lane.b32.xlu0 %v1554, 64
        %v1556 = vpop.permute.xlu0 %1555
        %v1558 = vadd.f32 %v385, %v1556
        %v1560 = vrot.slane %v1558, 1
        %v1561 = vrot.slane %v1558, 2
        %v1562 = vrot.slane %v1558, 3
        %v1563 = vrot.slane %v1558, 4
        %v1564 = vrot.slane %v1558, 5
        %v1565 = vrot.slane %v1558, 6
        %v1566 = vrot.slane %v1558, 7
        %v1567 = vperm.slane %v1558, 0
        %v1568 = vperm.slane %v1560, 0
        %v1569 = vperm.slane %v1561, 0
        %v1570 = vperm.slane %v1562, 0
        %v1571 = vperm.slane %v1563, 0
        %v1572 = vperm.slane %v1564, 0
        %v1573 = vperm.slane %v1565, 0
        %v1574 = vperm.slane %v1566, 0
        %1575 = vrot.lane.b32.xlu0 %v1567, 64
        %v1576 = vpop.permute.xlu0 %1575
        %1577 = vrot.lane.b32.xlu0 %v1568, 64
        %v1578 = vpop.permute.xlu0 %1577
        %1579 = vrot.lane.b32.xlu0 %v1569, 64
        %v1580 = vpop.permute.xlu0 %1579
        %1581 = vrot.lane.b32.xlu0 %v1570, 64
        %v1582 = vpop.permute.xlu0 %1581
        %1583 = vrot.lane.b32.xlu0 %v1571, 64
        %v1584 = vpop.permute.xlu0 %1583
        %1585 = vrot.lane.b32.xlu0 %v1572, 64
        %v1586 = vpop.permute.xlu0 %1585
        %1587 = vrot.lane.b32.xlu0 %v1573, 64
        %v1588 = vpop.permute.xlu0 %1587
        %1589 = vrot.lane.b32.xlu0 %v1574, 64
        %v1590 = vpop.permute.xlu0 %1589
        %1599 = vst.msk [vmem:[%s300 + $0xc] sm:$0x1] %vm825, %v1576
        %1600 = vst.msk [vmem:[%s300 + $0x1c] sm:$0x1] %vm825, %v1578
        %1601 = vst.msk [vmem:[%s300 + $0x2c] sm:$0x1] %vm825, %v1580
        %1602 = vst.msk [vmem:[%s300 + $0x3c] sm:$0x1] %vm825, %v1582
        %1603 = vst.msk [vmem:[%s300 + $0x4c] sm:$0x1] %vm825, %v1584
        %1604 = vst.msk [vmem:[%s300 + $0x5c] sm:$0x1] %vm825, %v1586
        %1605 = vst.msk [vmem:[%s300 + $0x6c] sm:$0x1] %vm825, %v1588
        %1606 = vst.msk [vmem:[%s300 + $0x7c] sm:$0x1] %vm825, %v1590
        %v1607 = vrot.slane %v616, 5
        %v1608 = vrot.slane %v639, 4
        %v1609 = vsel %vm788, %v1608, %v1607
        %v1610 = vrot.slane %v662, 3
        %v1611 = vsel %vm791, %v1610, %v1609
        %v1612 = vrot.slane %v685, 2
        %v1613 = vsel %vm794, %v1612, %v1611
        %v1614 = vrot.slane %v708, 1
        %v1615 = vsel %vm797, %v1614, %v1613
        %v1616 = vsel %vm800, %v731, %v1615
        %v1617 = vrot.slane %v754, 7
        %v1618 = vsel %vm803, %v1617, %v1616
        %v1619 = vrot.slane %v777, 6
        %v1620 = vsel %vm806, %v1619, %v1618
        %1621 = vrot.lane.b32.xlu0 %v1620, 80
        %v1622 = vpop.permute.xlu0 %1621
        %v1624 = vadd.f32 %v385, %v1622
        %v1626 = vrot.slane %v1624, 1
        %v1627 = vrot.slane %v1624, 2
        %v1628 = vrot.slane %v1624, 3
        %v1629 = vrot.slane %v1624, 4
        %v1630 = vrot.slane %v1624, 5
        %v1631 = vrot.slane %v1624, 6
        %v1632 = vrot.slane %v1624, 7
        %v1633 = vperm.slane %v1624, 0
        %v1634 = vperm.slane %v1626, 0
        %v1635 = vperm.slane %v1627, 0
        %v1636 = vperm.slane %v1628, 0
        %v1637 = vperm.slane %v1629, 0
        %v1638 = vperm.slane %v1630, 0
        %v1639 = vperm.slane %v1631, 0
        %v1640 = vperm.slane %v1632, 0
        %1641 = vrot.lane.b32.xlu0 %v1633, 48
        %v1642 = vpop.permute.xlu0 %1641
        %1643 = vrot.lane.b32.xlu0 %v1634, 48
        %v1644 = vpop.permute.xlu0 %1643
        %1645 = vrot.lane.b32.xlu0 %v1635, 48
        %v1646 = vpop.permute.xlu0 %1645
        %1647 = vrot.lane.b32.xlu0 %v1636, 48
        %v1648 = vpop.permute.xlu0 %1647
        %1649 = vrot.lane.b32.xlu0 %v1637, 48
        %v1650 = vpop.permute.xlu0 %1649
        %1651 = vrot.lane.b32.xlu0 %v1638, 48
        %v1652 = vpop.permute.xlu0 %1651
        %1653 = vrot.lane.b32.xlu0 %v1639, 48
        %v1654 = vpop.permute.xlu0 %1653
        %1655 = vrot.lane.b32.xlu0 %v1640, 48
        %v1656 = vpop.permute.xlu0 %1655
        %1665 = vst.msk [vmem:[%s300 + $0xd] sm:$0x1] %vm825, %v1642
        %1666 = vst.msk [vmem:[%s300 + $0x1d] sm:$0x1] %vm825, %v1644
        %1667 = vst.msk [vmem:[%s300 + $0x2d] sm:$0x1] %vm825, %v1646
        %1668 = vst.msk [vmem:[%s300 + $0x3d] sm:$0x1] %vm825, %v1648
        %1669 = vst.msk [vmem:[%s300 + $0x4d] sm:$0x1] %vm825, %v1650
        %1670 = vst.msk [vmem:[%s300 + $0x5d] sm:$0x1] %vm825, %v1652
        %1671 = vst.msk [vmem:[%s300 + $0x6d] sm:$0x1] %vm825, %v1654
        %1672 = vst.msk [vmem:[%s300 + $0x7d] sm:$0x1] %vm825, %v1656
        %v1673 = vrot.slane %v616, 6
        %v1674 = vrot.slane %v639, 5
        %v1675 = vsel %vm788, %v1674, %v1673
        %v1676 = vrot.slane %v662, 4
        %v1677 = vsel %vm791, %v1676, %v1675
        %v1678 = vrot.slane %v685, 3
        %v1679 = vsel %vm794, %v1678, %v1677
        %v1680 = vrot.slane %v708, 2
        %v1681 = vsel %vm797, %v1680, %v1679
        %v1682 = vrot.slane %v731, 1
        %v1683 = vsel %vm800, %v1682, %v1681
        %v1684 = vsel %vm803, %v754, %v1683
        %v1685 = vrot.slane %v777, 7
        %v1686 = vsel %vm806, %v1685, %v1684
        %1687 = vrot.lane.b32.xlu0 %v1686, 96
        %v1688 = vpop.permute.xlu0 %1687
        %v1690 = vadd.f32 %v385, %v1688
        %v1692 = vrot.slane %v1690, 1
        %v1693 = vrot.slane %v1690, 2
        %v1694 = vrot.slane %v1690, 3
        %v1695 = vrot.slane %v1690, 4
        %v1696 = vrot.slane %v1690, 5
        %v1697 = vrot.slane %v1690, 6
        %v1698 = vrot.slane %v1690, 7
        %v1699 = vperm.slane %v1690, 0
        %v1700 = vperm.slane %v1692, 0
        %v1701 = vperm.slane %v1693, 0
        %v1702 = vperm.slane %v1694, 0
        %v1703 = vperm.slane %v1695, 0
        %v1704 = vperm.slane %v1696, 0
        %v1705 = vperm.slane %v1697, 0
        %v1706 = vperm.slane %v1698, 0
        %1707 = vrot.lane.b32.xlu0 %v1699, 32
        %v1708 = vpop.permute.xlu0 %1707
        %1709 = vrot.lane.b32.xlu0 %v1700, 32
        %v1710 = vpop.permute.xlu0 %1709
        %1711 = vrot.lane.b32.xlu0 %v1701, 32
        %v1712 = vpop.permute.xlu0 %1711
        %1713 = vrot.lane.b32.xlu0 %v1702, 32
        %v1714 = vpop.permute.xlu0 %1713
        %1715 = vrot.lane.b32.xlu0 %v1703, 32
        %v1716 = vpop.permute.xlu0 %1715
        %1717 = vrot.lane.b32.xlu0 %v1704, 32
        %v1718 = vpop.permute.xlu0 %1717
        %1719 = vrot.lane.b32.xlu0 %v1705, 32
        %v1720 = vpop.permute.xlu0 %1719
        %1721 = vrot.lane.b32.xlu0 %v1706, 32
        %v1722 = vpop.permute.xlu0 %1721
        %1731 = vst.msk [vmem:[%s300 + $0xe] sm:$0x1] %vm825, %v1708
        %1732 = vst.msk [vmem:[%s300 + $0x1e] sm:$0x1] %vm825, %v1710
        %1733 = vst.msk [vmem:[%s300 + $0x2e] sm:$0x1] %vm825, %v1712
        %1734 = vst.msk [vmem:[%s300 + $0x3e] sm:$0x1] %vm825, %v1714
        %1735 = vst.msk [vmem:[%s300 + $0x4e] sm:$0x1] %vm825, %v1716
        %1736 = vst.msk [vmem:[%s300 + $0x5e] sm:$0x1] %vm825, %v1718
        %1737 = vst.msk [vmem:[%s300 + $0x6e] sm:$0x1] %vm825, %v1720
        %1738 = vst.msk [vmem:[%s300 + $0x7e] sm:$0x1] %vm825, %v1722
        %v1739 = vrot.slane %v616, 7
        %v1740 = vrot.slane %v639, 6
        %v1741 = vsel %vm788, %v1740, %v1739
        %v1742 = vrot.slane %v662, 5
        %v1743 = vsel %vm791, %v1742, %v1741
        %v1744 = vrot.slane %v685, 4
        %v1745 = vsel %vm794, %v1744, %v1743
        %v1746 = vrot.slane %v708, 3
        %v1747 = vsel %vm797, %v1746, %v1745
        %v1748 = vrot.slane %v731, 2
        %v1749 = vsel %vm800, %v1748, %v1747
        %v1750 = vrot.slane %v754, 1
        %v1751 = vsel %vm803, %v1750, %v1749
        %v1752 = vsel %vm806, %v777, %v1751
        %1753 = vrot.lane.b32.xlu0 %v1752, 112
        %v1754 = vpop.permute.xlu0 %1753
        %v1756 = vadd.f32 %v385, %v1754
        %v1758 = vrot.slane %v1756, 1
        %v1759 = vrot.slane %v1756, 2
        %v1760 = vrot.slane %v1756, 3
        %v1761 = vrot.slane %v1756, 4
        %v1762 = vrot.slane %v1756, 5
        %v1763 = vrot.slane %v1756, 6
        %v1764 = vrot.slane %v1756, 7
        %v1765 = vperm.slane %v1756, 0
        %v1766 = vperm.slane %v1758, 0
        %v1767 = vperm.slane %v1759, 0
        %v1768 = vperm.slane %v1760, 0
        %v1769 = vperm.slane %v1761, 0
        %v1770 = vperm.slane %v1762, 0
        %v1771 = vperm.slane %v1763, 0
        %v1772 = vperm.slane %v1764, 0
        %1773 = vrot.lane.b32.xlu0 %v1765, 16
        %v1774 = vpop.permute.xlu0 %1773
        %1775 = vrot.lane.b32.xlu0 %v1766, 16
        %v1776 = vpop.permute.xlu0 %1775
        %1777 = vrot.lane.b32.xlu0 %v1767, 16
        %v1778 = vpop.permute.xlu0 %1777
        %1779 = vrot.lane.b32.xlu0 %v1768, 16
        %v1780 = vpop.permute.xlu0 %1779
        %1781 = vrot.lane.b32.xlu0 %v1769, 16
        %v1782 = vpop.permute.xlu0 %1781
        %1783 = vrot.lane.b32.xlu0 %v1770, 16
        %v1784 = vpop.permute.xlu0 %1783
        %1785 = vrot.lane.b32.xlu0 %v1771, 16
        %v1786 = vpop.permute.xlu0 %1785
        %1787 = vrot.lane.b32.xlu0 %v1772, 16
        %v1788 = vpop.permute.xlu0 %1787
        %1797 = vst.msk [vmem:[%s300 + $0xf] sm:$0x1] %vm825, %v1774
        %1798 = vst.msk [vmem:[%s300 + $0x1f] sm:$0x1] %vm825, %v1776
        %1799 = vst.msk [vmem:[%s300 + $0x2f] sm:$0x1] %vm825, %v1778
        %1800 = vst.msk [vmem:[%s300 + $0x3f] sm:$0x1] %vm825, %v1780
        %1801 = vst.msk [vmem:[%s300 + $0x4f] sm:$0x1] %vm825, %v1782
        %1802 = vst.msk [vmem:[%s300 + $0x5f] sm:$0x1] %vm825, %v1784
        %1803 = vst.msk [vmem:[%s300 + $0x6f] sm:$0x1] %vm825, %v1786
        %1804 = vst.msk [vmem:[%s300 + $0x7f] sm:$0x1] %vm825, %v1788
        %s1805 = sand.u32 %s185, 1
        %s1806 = scalar_lea.sflag [#allocation3], %s1805
        %s1807 = sand.u32 %s185, 1
        %s1808 = smul.addr %s1807, 128
        %s1809 = scalar_lea.vmem [#allocation2], %s1808
        // Predicated region
        $region45: #{local_up_forward.1} parent=43 // pred_check
          %p1810 = pneg %p195
        $region46: #{local_up_forward.1} parent=43 // pred_check_branch
          %1812 = sbr.rel (%p1810) target = $region48
        $region47: #{local_up_forward.1} parent=43 // pred_region
          %s1813 = smul.u32 2, %s25
          %1815 = vsyncadd %s1806, 0
          %s1816 = smul.addr %s24, 16
          %s1817 = sadd.s32 %s1813, %s1816
          %s1818 = smul.addr %s1817, 8
          %s1819 = scalar_lea.hbm %s6, %s1818
          %s1820 = sshll.u32 %s1809, 4
          %s1821 = int_to_ptr.vmem [resolvable:$true] %s1820
          %s1822 = sshll.u32 %s1819, 4
          %s1823 = int_to_ptr.hbm [resolvable:$true] %s1822
          %1828 = dma.vmem_to_hbm [thread:$0]  %s1821, 2048, %s1823, %s1806, 128, 128, 8
        $region48: #{local_up_forward.1} parent=43 // pred_fallthru
          _
      $region44: #{local_up_forward.1} parent=5 // pred_fallthru
        _
      %p1829 = scmp.le.s32.totalorder 2, %s15
      // Predicated region
      $region49: #{local_up_forward.1} parent=5 // pred_check
        %p1830 = pneg %p1829
      $region50: #{local_up_forward.1} parent=5 // pred_check_branch
        %1832 = sbr.rel (%p1830) target = $region52
      $region51: #{local_up_forward.1} parent=5 // pred_region
        %s1833 = ssub.s32 %s15, 2
        // Predicated region
        $region53: #{local_up_forward.1} parent=51 // pred_check
          %p1834 = pneg %p201
        $region54: #{local_up_forward.1} parent=51 // pred_check_branch
          %1836 = sbr.rel (%p1834) target = $region56
        $region55: #{local_up_forward.1} parent=51 // pred_region
          %s1837 = sand.u32 %s186, 1
          %s1838 = scalar_lea.sflag [#allocation3], %s1837
          %s1839 = sand.u32 %s186, 1
          %s1840 = smul.addr %s1839, 128
          %s1841 = scalar_lea.vmem [#allocation2], %s1840
          %1843 = dma.done %s1838, 2048
        $region56: #{local_up_forward.1} parent=51 // pred_fallthru
          _
      $region52: #{local_up_forward.1} parent=5 // pred_fallthru
        _
    $region6: #{local_up_forward.1} parent=1 // loop_footer
      %s19 = sadd.s32 1, %s15
    $region7: #{local_up_forward.1} parent=1 // loop_footer_branch
      %14 = sbr.rel target = $region3
    $region8: #{local_up_forward.1} parent=1 // loop_exit
      _
    %1844 = vsyncpa [#allocation3], 1
    %s1845 = scalar_lea.sflag [#allocation3], 1
    %1846 = vsyncpa %s1845, 1

</llo_original>
